<compile_context>
chip_gen: v7x
topology: tpu7x:2x2x1
jax: 0.10.0
libtpu: 0.0.40
codegen_flags: <defaults>
</compile_context>

<pallas_src>
import functools

import jax
import jax.numpy as jnp
import numpy as np
from jax.experimental import pallas as pl
from jax.experimental.pallas import tpu as pltpu

# ----------------------- small, module-consistent sizes -----------------------
VOCAB_SIZE = 64
V_PAD = 128            # lane-dense padded vocab for the projection output
EMBED_SIZE = 32
HIDDEN_SIZE = 32
NUM_LAYERS = 1         # module default
BATCH = 2
SEQ_LEN = 8
B_PAD = 8              # per-timestep row block padded to 8 sublanes (aligned vld/vst)


# --------------------------- fused forward kernel -----------------------------
def _rnnlm_fused_kernel(ids_ref, hc0_ref, w_ref, b_ref,
                        logits_ref, hcn_ref,
                        gates_scr, out_scr,
                        *, T, B, BP, H, E, V, VP):
    """Whole forward pass (embedding + biLSTM + projection), grid=().

    Packed bf16 weight slab rows (all 8H = 256 lanes wide, 8-row aligned blocks):
      [0        , 2V)         block-diag embedding  (cols [0:2E))
      [2V       , 2V+2E)      W_ih both directions  (full width)
      [2V+2E    , 2V+2E+2H)   block-diag W_hh       (full width)
      [2V+2E+2H , ... +2H)    W_out^T               (cols [0:VP))
    Combined gate-column layout (fwd in lanes [0:H), bwd in [H:2H) of each block):
      [0:2H)=i   [2H:4H)=f   [4H:6H)=o   [6H:8H)=g
    """
    emb_r0 = 0
    wih_r0 = 2 * V
    whh_r0 = 2 * V + 2 * E
    wout_r0 = 2 * V + 2 * E + 2 * H
    TBP = T * BP

    # ---- prologue: in-kernel embedding (one-hot @ MXU) + ONE hoisted input
    #      projection covering all timesteps and both directions ----
    ids = ids_ref[...]                                            # (TBP, 2) int32
    lane = jax.lax.broadcasted_iota(jnp.int32, (TBP, 2 * V), 1)
    onehot = ((lane == ids[:, 0:1]).astype(jnp.float32)
              + (lane == ids[:, 1:2]).astype(jnp.float32)).astype(jnp.bfloat16)
    emb_cat = w_ref[emb_r0:emb_r0 + 2 * V, 0:2 * E]               # (2V, 2E) bf16
    x_cat = jnp.dot(onehot, emb_cat, preferred_element_type=jnp.float32)
    wih = w_ref[wih_r0:wih_r0 + 2 * E, :]                         # (2E, 8H) bf16
    gates_scr[...] = (jnp.dot(x_cat.astype(jnp.bfloat16), wih,
                              preferred_element_type=jnp.float32)
                      + b_ref[0:1, :])                            # (TBP, 8H) f32

    whh = w_ref[whh_r0:whh_r0 + 2 * H, :]                         # (2H, 8H) bf16

    def step(t, carry):
        h, c = carry                                              # (BP, 2H) f32
        row = pl.multiple_of(t * BP, BP)
        g_in = gates_scr[pl.ds(row, BP), :]                       # aligned (BP, 8H)
        # one recurrent MXU matmul for BOTH directions (block-diag W_hh),
        # accumulate-into-result form (MRB-friendly on v7x)
        g_all = g_in + jnp.dot(h.astype(jnp.bfloat16), whh,
                               preferred_element_type=jnp.float32)
        sig = jax.nn.sigmoid(g_all[:, 0:6 * H])                   # i|f|o, both dirs
        g_t = jnp.tanh(g_all[:, 6 * H:8 * H])                     # g, both dirs
        i_g = sig[:, 0:2 * H]
        f_g = sig[:, 2 * H:4 * H]
        o_g = sig[:, 4 * H:6 * H]
        c_new = f_g * c + i_g * g_t
        h_new = o_g * jnp.tanh(c_new)
        # fwd half (lanes [0:H)) is the output at time t, bwd half at time T-1-t
        out_scr[pl.ds(row, BP), 0:H] = h_new[:, 0:H]
        rrow = pl.multiple_of((T - 1 - t) * BP, BP)
        out_scr[pl.ds(rrow, BP), H:2 * H] = h_new[:, H:2 * H]
        return h_new, c_new

    h_fin, c_fin = jax.lax.fori_loop(0, T, step,
                                     (hc0_ref[0], hc0_ref[1]),
                                     unroll=True)

    # final (h_n, c_n) written exactly once (valid batch rows only)
    hcn_ref[0] = h_fin[0:B, 0:H]
    hcn_ref[1] = h_fin[0:B, H:2 * H]
    hcn_ref[2] = c_fin[0:B, 0:H]
    hcn_ref[3] = c_fin[0:B, H:2 * H]

    # ---- fused, lane-dense output projection: ONE (TBP, 2H)@(2H, VP) dot ----
    wout = w_ref[wout_r0:wout_r0 + 2 * H, 0:VP]                   # (2H, VP) bf16
    logits_ref[...] = (jnp.dot(out_scr[...].astype(jnp.bfloat16), wout,
                               preferred_element_type=jnp.float32)
                       + b_ref[1:2, 0:VP])


def rnnlm_fused(ids_cat, hc0_pad, w_slab, b_slab, *, T, B):
    H, E, V = HIDDEN_SIZE, EMBED_SIZE, VOCAB_SIZE
    TBP = T * B_PAD
    kernel = functools.partial(_rnnlm_fused_kernel, T=T, B=B, BP=B_PAD,
                               H=H, E=E, V=V, VP=V_PAD)
    return pl.pallas_call(
        kernel,
        out_shape=(
            jax.ShapeDtypeStruct((TBP, V_PAD), jnp.float32),   # padded time-major logits
            jax.ShapeDtypeStruct((4, B, H), jnp.float32),      # [h_f, h_b, c_f, c_b]
        ),
        in_specs=[
            pl.BlockSpec(ids_cat.shape, lambda: (0, 0)),       # id pairs (int32)
            pl.BlockSpec(hc0_pad.shape, lambda: (0, 0, 0)),    # padded (h0, c0)
            pl.BlockSpec(w_slab.shape, lambda: (0, 0)),        # one bf16 weight slab
            pl.BlockSpec(b_slab.shape, lambda: (0, 0)),        # one f32 bias slab
        ],
        out_specs=(
            pl.BlockSpec((TBP, V_PAD), lambda: (0, 0)),
            pl.BlockSpec((4, B, H), lambda: (0, 0, 0)),
        ),
        scratch_shapes=[
            pltpu.VMEM((TBP, 8 * H), jnp.float32),   # hoisted input-side gates
            pltpu.VMEM((TBP, 2 * H), jnp.float32),   # [h_fwd | h_bwd] per time row
        ],
    )(ids_cat, hc0_pad, w_slab, b_slab)


# ------------------------------ RNNLM forward ---------------------------------
def rnnlm_forward(params, input_ids, hidden):
    """input_ids: (B, T) int32; hidden = (h0, c0), each (2*num_layers, B, H).

    Returns (logits (B*T, V), (h_n, c_n)) — same semantics as RNNLM.forward."""
    h0, c0 = hidden
    B, T = input_ids.shape
    H = HIDDEN_SIZE

    # id pairs per (time, batch) row: col 0 = fwd id at time t, col 1 = bwd id at
    # time T-1-t (+V so its one-hot lands in lanes [V:2V)).  Padded batch rows get
    # -1 -> all-zero one-hot -> zero embedding (garbage rows never reach the output).
    ids_f = input_ids.T.astype(jnp.int32)                        # (T, B)
    ids_b = input_ids[:, ::-1].T.astype(jnp.int32) + VOCAB_SIZE  # (T, B)
    ids_pair = jnp.stack([ids_f, ids_b], axis=-1)                # (T, B, 2)
    ids_cat = (jnp.full((T, B_PAD, 2), -1, jnp.int32)
               .at[:, :B, :].set(ids_pair)
               .reshape(T * B_PAD, 2))

    # initial state in kernel layout: (2, B_PAD, 2H), lanes = [fwd | bwd]
    hc0 = jnp.stack([h0, c0]).astype(jnp.float32)                # (2, 2, B, H)
    hc0 = hc0.transpose(0, 2, 1, 3).reshape(2, B, 2 * H)
    hc0_pad = jnp.zeros((2, B_PAD, 2 * H), jnp.float32).at[:, :B, :].set(hc0)

    logits_pad, hcn = rnnlm_fused(ids_cat, hc0_pad,
                                  params["w_slab"], params["b_slab"], T=T, B=B)

    # time-major padded (T*B_PAD, V_PAD) -> PyTorch's view(B*T, V) row order (b*T+t)
    logits = (logits_pad.reshape(T, B_PAD, V_PAD)[:, :B, :VOCAB_SIZE]
              .transpose(1, 0, 2).reshape(B * T, VOCAB_SIZE))
    hn = hcn[0:2]
    cn = hcn[2:4]
    return logits, (hn, cn)


# ---------------------------- pure-JAX reference ------------------------------
def _ref_lstm_dir(x_tbe, h0, c0, wi, wh, b):
    H = h0.shape[-1]

    def step(carry, x):
        h, c = carry
        gates = x @ wi + h @ wh + b
        i = jax.nn.sigmoid(gates[:, 0 * H:1 * H])
        f = jax.nn.sigmoid(gates[:, 1 * H:2 * H])
        g = jnp.tanh(gates[:, 2 * H:3 * H])
        o = jax.nn.sigmoid(gates[:, 3 * H:4 * H])
        c_new = f * c + i * g
        h_new = o * jnp.tanh(c_new)
        return (h_new, c_new), h_new

    (hT, cT), hs = jax.lax.scan(step, (h0, c0), x_tbe)
    return hs, hT, cT


def rnnlm_reference(params, input_ids, hidden):
    h0, c0 = hidden
    emb = jnp.take(params["embedding"], input_ids, axis=0)
    x_tbe = jnp.transpose(emb, (1, 0, 2)).astype(jnp.float32)
    hs_f, hT_f, cT_f = _ref_lstm_dir(x_tbe, h0[0], c0[0],
                                     params["w_ih_f"], params["w_hh_f"],
                                     params["b_f"])
    hs_b, hT_b, cT_b = _ref_lstm_dir(x_tbe[::-1], h0[1], c0[1],
                                     params["w_ih_b"], params["w_hh_b"],
                                     params["b_b"])
    hs_b = hs_b[::-1]
    out_bt = jnp.concatenate([jnp.transpose(hs_f, (1, 0, 2)),
                              jnp.transpose(hs_b, (1, 0, 2))], axis=-1)
    out_2d = out_bt.reshape(-1, out_bt.shape[-1])
    logits = out_2d @ params["w_out"].T + params["b_out"]
    hn = jnp.stack([hT_f, hT_b])
    cn = jnp.stack([cT_f, cT_b])
    return logits, (hn, cn)


# ------------------------------- param init -----------------------------------
def _scatter_gate_cols(w4h, direction, H):
    """Map a per-direction (rows, 4H) [i|f|g|o] matrix into the kernel's combined
    (rows, 8H) layout [i|f|o|g] x [fwd-lanes | bwd-lanes]."""
    blocks = {"i": w4h[:, 0:H], "f": w4h[:, H:2 * H],
              "g": w4h[:, 2 * H:3 * H], "o": w4h[:, 3 * H:4 * H]}
    out = jnp.zeros((w4h.shape[0], 8 * H), jnp.float32)
    for k, name in enumerate(("i", "f", "o", "g")):
        col0 = k * 2 * H + direction * H
        out = out.at[:, col0:col0 + H].set(blocks[name])
    return out


def init_params(key, vocab_size, embed_size, hidden_size):
    ks = jax.random.split(key, 12)
    H, E, V = hidden_size, embed_size, vocab_size
    bound = 1.0 / np.sqrt(hidden_size)

    def u(k, shape, lo, hi):
        return jax.random.uniform(k, shape, jnp.float32, lo, hi)

    embedding = u(ks[0], (V, E), -0.1, 0.1)                 # nn.Embedding init
    # LSTM weights stored pre-transposed for right-multiplication; b_ih + b_hh folded.
    w_ih_f = u(ks[1], (E, 4 * H), -bound, bound)
    w_hh_f = u(ks[2], (H, 4 * H), -bound, bound)
    b_f = u(ks[3], (1, 4 * H), -bound, bound) + u(ks[4], (1, 4 * H), -bound, bound)
    w_ih_b = u(ks[5], (E, 4 * H), -bound, bound)
    w_hh_b = u(ks[6], (H, 4 * H), -bound, bound)
    b_b = u(ks[7], (1, 4 * H), -bound, bound) + u(ks[8], (1, 4 * H), -bound, bound)
    w_out = u(ks[9], (V, 2 * H), -0.1, 0.1)                 # nn.Linear init
    b_out = jnp.zeros((V,), jnp.float32)

    # ---- packed kernel operands (built ONCE, outside jit) ----
    # one bf16 weight slab -> a single HBM->VMEM DMA; every block 8-row aligned.
    emb_blk = (jnp.zeros((2 * V, 8 * H), jnp.float32)
               .at[0:V, 0:E].set(embedding)
               .at[V:2 * V, E:2 * E].set(embedding))
    wih_blk = (jnp.zeros((2 * E, 8 * H), jnp.float32)
               .at[0:E, :].set(_scatter_gate_cols(w_ih_f, 0, H))
               .at[E:2 * E, :].set(_scatter_gate_cols(w_ih_b, 1, H)))
    whh_blk = (jnp.zeros((2 * H, 8 * H), jnp.float32)       # block-diagonal W_hh
               .at[0:H, :].set(_scatter_gate_cols(w_hh_f, 0, H))
               .at[H:2 * H, :].set(_scatter_gate_cols(w_hh_b, 1, H)))
    wout_blk = jnp.zeros((2 * H, 8 * H), jnp.float32).at[:, 0:V].set(w_out.T)
    w_slab = jnp.concatenate([emb_blk, wih_blk, whh_blk, wout_blk],
                             axis=0).astype(jnp.bfloat16)    # (320, 256) bf16

    gate_bias = _scatter_gate_cols(b_f, 0, H) + _scatter_gate_cols(b_b, 1, H)
    b_slab = (jnp.zeros((2, 8 * H), jnp.float32)             # f32 biases (one DMA)
              .at[0:1, :].set(gate_bias)
              .at[1, 0:V].set(b_out))

    return {
        # logical (reference) parameters
        "embedding": embedding,
        "w_ih_f": w_ih_f, "w_hh_f": w_hh_f, "b_f": b_f,
        "w_ih_b": w_ih_b, "w_hh_b": w_hh_b, "b_b": b_b,
        "w_out": w_out, "b_out": b_out,
        # packed kernel operands
        "w_slab": w_slab, "b_slab": b_slab,
    }


# ----------------------------------- main --------------------------------------
if __name__ == "__main__":
    key = jax.random.PRNGKey(0)
    k_param, k_ids, k_h, k_c = jax.random.split(key, 4)

    params = init_params(k_param, VOCAB_SIZE, EMBED_SIZE, HIDDEN_SIZE)

    input_ids = jax.random.randint(k_ids, (BATCH, SEQ_LEN), 0, VOCAB_SIZE,
                                   dtype=jnp.int32)
    h0 = jax.random.uniform(k_h, (2 * NUM_LAYERS, BATCH, HIDDEN_SIZE),
                            jnp.float32, -0.1, 0.1)
    c0 = jax.random.uniform(k_c, (2 * NUM_LAYERS, BATCH, HIDDEN_SIZE),
                            jnp.float32, -0.1, 0.1)

    logits, (hn, cn) = jax.jit(rnnlm_forward)(params, input_ids, (h0, c0))
    jax.block_until_ready((logits, hn, cn))

    # sanity check against a pure-JAX (f32) reference of the same math
    ref_logits, (ref_hn, ref_cn) = jax.jit(rnnlm_reference)(
        params, input_ids, (h0, c0))
    np.testing.assert_allclose(np.asarray(logits), np.asarray(ref_logits),
                               rtol=2e-2, atol=2e-2)
    np.testing.assert_allclose(np.asarray(hn), np.asarray(ref_hn),
                               rtol=2e-2, atol=2e-2)
    np.testing.assert_allclose(np.asarray(cn), np.asarray(ref_cn),
                               rtol=2e-2, atol=2e-2)

    assert logits.shape == (BATCH * SEQ_LEN, VOCAB_SIZE)
    assert hn.shape == (2 * NUM_LAYERS, BATCH, HIDDEN_SIZE)
    print("KERNEL_OK")
</pallas_src>

<mosaic_0001>
module attributes {stable_mosaic.version = 11 : i64} {
  func.func @_rnnlm_fused_kernel(%arg0: memref<64x2xi32, #tpu.memory_space<vmem>>, %arg1: memref<2x8x64xf32, #tpu.memory_space<vmem>>, %arg2: memref<320x256xbf16, #tpu.memory_space<vmem>>, %arg3: memref<2x256xf32, #tpu.memory_space<vmem>>, %arg4: memref<64x128xf32, #tpu.memory_space<vmem>>, %arg5: memref<4x2x32xf32, #tpu.memory_space<vmem>>, %arg6: memref<64x256xf32, #tpu.memory_space<vmem>>, %arg7: memref<64x64xf32, #tpu.memory_space<vmem>>) attributes {dimension_semantics = [], scalar_prefetch = 0 : i64, scratch_operands = 2 : i64, tpu.core_type = #tpu.core_type<tc>} {
    %c0 = arith.constant 0 : index
    %c0_0 = arith.constant 0 : index
    %0 = vector.load %arg0[%c0, %c0_0] : memref<64x2xi32, #tpu.memory_space<vmem>>, vector<64x2xi32>
    %1 = tpu.iota {dimensions = array<i32: 1>} : vector<64x128xi32>
    %2 = vector.extract_strided_slice %0 {offsets = [0, 0], sizes = [64, 1], strides = [1, 1]} : vector<64x2xi32> to vector<64x1xi32>
    %3 = vector.broadcast %2 : vector<64x1xi32> to vector<64x128xi32>
    %4 = arith.cmpi eq, %1, %3 : vector<64x128xi32>
    %5 = arith.extui %4 : vector<64x128xi1> to vector<64x128xi32>
    %6 = arith.sitofp %5 : vector<64x128xi32> to vector<64x128xf32>
    %7 = vector.extract_strided_slice %0 {offsets = [0, 1], sizes = [64, 1], strides = [1, 1]} : vector<64x2xi32> to vector<64x1xi32>
    %8 = vector.broadcast %7 : vector<64x1xi32> to vector<64x128xi32>
    %9 = arith.cmpi eq, %1, %8 : vector<64x128xi32>
    %10 = arith.extui %9 : vector<64x128xi1> to vector<64x128xi32>
    %11 = arith.sitofp %10 : vector<64x128xi32> to vector<64x128xf32>
    %12 = arith.addf %6, %11 : vector<64x128xf32>
    %13 = arith.truncf %12 : vector<64x128xf32> to vector<64x128xbf16>
    %c0_1 = arith.constant 0 : index
    %c0_2 = arith.constant 0 : index
    %14 = vector.load %arg2[%c0_1, %c0_2] : memref<320x256xbf16, #tpu.memory_space<vmem>>, vector<128x64xbf16>
    %cst = arith.constant dense<0.000000e+00> : vector<64x64xf32>
    %15 = tpu.matmul %13, %14, %cst {dimension_numbers = #tpu.dot_dimension_numbers<[1], [0], [0], [1], [0, 0, 1, 1], [], []>} : vector<64x128xbf16>, vector<128x64xbf16>, vector<64x64xf32> -> vector<64x64xf32>
    %c128 = arith.constant 128 : index
    %c0_3 = arith.constant 0 : index
    %16 = vector.load %arg2[%c128, %c0_3] : memref<320x256xbf16, #tpu.memory_space<vmem>>, vector<64x256xbf16>
    %17 = arith.truncf %15 : vector<64x64xf32> to vector<64x64xbf16>
    %cst_4 = arith.constant dense<0.000000e+00> : vector<64x256xf32>
    %18 = tpu.matmul %17, %16, %cst_4 {dimension_numbers = #tpu.dot_dimension_numbers<[1], [0], [0], [1], [0, 0, 1, 1], [], []>} : vector<64x64xbf16>, vector<64x256xbf16>, vector<64x256xf32> -> vector<64x256xf32>
    %c0_5 = arith.constant 0 : index
    %c0_6 = arith.constant 0 : index
    %19 = vector.load %arg3[%c0_5, %c0_6] : memref<2x256xf32, #tpu.memory_space<vmem>>, vector<1x256xf32>
    %20 = vector.broadcast %19 : vector<1x256xf32> to vector<64x256xf32>
    %21 = arith.addf %18, %20 : vector<64x256xf32>
    %c0_7 = arith.constant 0 : index
    %c0_8 = arith.constant 0 : index
    %22 = vector.load %arg6[%c0_7, %c0_8] : memref<64x256xf32, #tpu.memory_space<vmem>>, vector<64x256xf32>
    tpu.vector_store %arg6[%c0_7, %c0_8], %21 {strides = array<i32>} : memref<64x256xf32, #tpu.memory_space<vmem>>, vector<64x256xf32>,
    %c192 = arith.constant 192 : index
    %c0_9 = arith.constant 0 : index
    %23 = vector.load %arg2[%c192, %c0_9] : memref<320x256xbf16, #tpu.memory_space<vmem>>, vector<64x256xbf16>
    %c0_10 = arith.constant 0 : index
    %c0_11 = arith.constant 0 : index
    %c0_12 = arith.constant 0 : index
    %24 = vector.load %arg1[%c0_10, %c0_11, %c0_12] : memref<2x8x64xf32, #tpu.memory_space<vmem>>, vector<1x8x64xf32>
    %25 = vector.shape_cast %24 : vector<1x8x64xf32> to vector<8x64xf32>
    %c1 = arith.constant 1 : index
    %c0_13 = arith.constant 0 : index
    %c0_14 = arith.constant 0 : index
    %26 = vector.load %arg1[%c1, %c0_13, %c0_14] : memref<2x8x64xf32, #tpu.memory_space<vmem>>, vector<1x8x64xf32>
    %27 = vector.shape_cast %26 : vector<1x8x64xf32> to vector<8x64xf32>
    %c0_i32 = arith.constant 0 : i32
    %c8_i32 = arith.constant 8 : i32
    %28 = arith.muli %c0_i32, %c8_i32 : i32
    %29 = tpu.assume_multiple %28, 8 : i32
    %30 = arith.index_cast %29 : i32 to index
    %c0_15 = arith.constant 0 : index
    %31 = vector.load %arg6[%30, %c0_15] : memref<64x256xf32, #tpu.memory_space<vmem>>, vector<8x256xf32>
    %32 = arith.truncf %25 : vector<8x64xf32> to vector<8x64xbf16>
    %cst_16 = arith.constant dense<0.000000e+00> : vector<8x256xf32>
    %33 = tpu.matmul %32, %23, %cst_16 {dimension_numbers = #tpu.dot_dimension_numbers<[1], [0], [0], [1], [0, 0, 1, 1], [], []>} : vector<8x64xbf16>, vector<64x256xbf16>, vector<8x256xf32> -> vector<8x256xf32>
    %34 = arith.addf %31, %33 : vector<8x256xf32>
    %35 = vector.extract_strided_slice %34 {offsets = [0, 0], sizes = [8, 192], strides = [1, 1]} : vector<8x256xf32> to vector<8x192xf32>
    %36 = arith.negf %35 : vector<8x192xf32>
    %37 = math.exp %36 : vector<8x192xf32>
    %cst_17 = arith.constant 1.000000e+00 : f32
    %38 = vector.broadcast %cst_17 : f32 to vector<8x192xf32>
    %39 = arith.addf %38, %37 : vector<8x192xf32>
    %40 = arith.divf %38, %39 : vector<8x192xf32>
    %41 = vector.extract_strided_slice %34 {offsets = [0, 192], sizes = [8, 64], strides = [1, 1]} : vector<8x256xf32> to vector<8x64xf32>
    %42 = math.tanh %41 : vector<8x64xf32>
    %43 = vector.extract_strided_slice %40 {offsets = [0, 0], sizes = [8, 64], strides = [1, 1]} : vector<8x192xf32> to vector<8x64xf32>
    %44 = vector.extract_strided_slice %40 {offsets = [0, 64], sizes = [8, 64], strides = [1, 1]} : vector<8x192xf32> to vector<8x64xf32>
    %45 = vector.extract_strided_slice %40 {offsets = [0, 128], sizes = [8, 64], strides = [1, 1]} : vector<8x192xf32> to vector<8x64xf32>
    %46 = arith.mulf %44, %27 : vector<8x64xf32>
    %47 = arith.mulf %43, %42 : vector<8x64xf32>
    %48 = arith.addf %46, %47 : vector<8x64xf32>
    %49 = math.tanh %48 : vector<8x64xf32>
    %50 = arith.mulf %45, %49 : vector<8x64xf32>
    %51 = vector.extract_strided_slice %50 {offsets = [0, 0], sizes = [8, 32], strides = [1, 1]} : vector<8x64xf32> to vector<8x32xf32>
    %52 = arith.index_cast %29 : i32 to index
    %c0_18 = arith.constant 0 : index
    %53 = vector.load %arg7[%52, %c0_18] : memref<64x64xf32, #tpu.memory_space<vmem>>, vector<8x32xf32>
    tpu.vector_store %arg7[%52, %c0_18], %51 {strides = array<i32>} : memref<64x64xf32, #tpu.memory_space<vmem>>, vector<8x32xf32>,
    %c7_i32 = arith.constant 7 : i32
    %54 = arith.subi %c7_i32, %c0_i32 : i32
    %c8_i32_19 = arith.constant 8 : i32
    %55 = arith.muli %54, %c8_i32_19 : i32
    %56 = tpu.assume_multiple %55, 8 : i32
    %57 = vector.extract_strided_slice %50 {offsets = [0, 32], sizes = [8, 32], strides = [1, 1]} : vector<8x64xf32> to vector<8x32xf32>
    %58 = arith.index_cast %56 : i32 to index
    %c32 = arith.constant 32 : index
    %59 = vector.load %arg7[%58, %c32] : memref<64x64xf32, #tpu.memory_space<vmem>>, vector<8x32xf32>
    tpu.vector_store %arg7[%58, %c32], %57 {strides = array<i32>} : memref<64x64xf32, #tpu.memory_space<vmem>>, vector<8x32xf32>,
    %c1_i32 = arith.constant 1 : i32
    %c8_i32_20 = arith.constant 8 : i32
    %60 = arith.muli %c1_i32, %c8_i32_20 : i32
    %61 = tpu.assume_multiple %60, 8 : i32
    %62 = arith.index_cast %61 : i32 to index
    %c0_21 = arith.constant 0 : index
    %63 = vector.load %arg6[%62, %c0_21] : memref<64x256xf32, #tpu.memory_space<vmem>>, vector<8x256xf32>
    %64 = arith.truncf %50 : vector<8x64xf32> to vector<8x64xbf16>
    %cst_22 = arith.constant dense<0.000000e+00> : vector<8x256xf32>
    %65 = tpu.matmul %64, %23, %cst_22 {dimension_numbers = #tpu.dot_dimension_numbers<[1], [0], [0], [1], [0, 0, 1, 1], [], []>} : vector<8x64xbf16>, vector<64x256xbf16>, vector<8x256xf32> -> vector<8x256xf32>
    %66 = arith.addf %63, %65 : vector<8x256xf32>
    %67 = vector.extract_strided_slice %66 {offsets = [0, 0], sizes = [8, 192], strides = [1, 1]} : vector<8x256xf32> to vector<8x192xf32>
    %68 = arith.negf %67 : vector<8x192xf32>
    %69 = math.exp %68 : vector<8x192xf32>
    %cst_23 = arith.constant 1.000000e+00 : f32
    %70 = vector.broadcast %cst_23 : f32 to vector<8x192xf32>
    %71 = arith.addf %70, %69 : vector<8x192xf32>
    %72 = arith.divf %70, %71 : vector<8x192xf32>
    %73 = vector.extract_strided_slice %66 {offsets = [0, 192], sizes = [8, 64], strides = [1, 1]} : vector<8x256xf32> to vector<8x64xf32>
    %74 = math.tanh %73 : vector<8x64xf32>
    %75 = vector.extract_strided_slice %72 {offsets = [0, 0], sizes = [8, 64], strides = [1, 1]} : vector<8x192xf32> to vector<8x64xf32>
    %76 = vector.extract_strided_slice %72 {offsets = [0, 64], sizes = [8, 64], strides = [1, 1]} : vector<8x192xf32> to vector<8x64xf32>
    %77 = vector.extract_strided_slice %72 {offsets = [0, 128], sizes = [8, 64], strides = [1, 1]} : vector<8x192xf32> to vector<8x64xf32>
    %78 = arith.mulf %76, %48 : vector<8x64xf32>
    %79 = arith.mulf %75, %74 : vector<8x64xf32>
    %80 = arith.addf %78, %79 : vector<8x64xf32>
    %81 = math.tanh %80 : vector<8x64xf32>
    %82 = arith.mulf %77, %81 : vector<8x64xf32>
    %83 = vector.extract_strided_slice %82 {offsets = [0, 0], sizes = [8, 32], strides = [1, 1]} : vector<8x64xf32> to vector<8x32xf32>
    %84 = arith.index_cast %61 : i32 to index
    %c0_24 = arith.constant 0 : index
    %85 = vector.load %arg7[%84, %c0_24] : memref<64x64xf32, #tpu.memory_space<vmem>>, vector<8x32xf32>
    tpu.vector_store %arg7[%84, %c0_24], %83 {strides = array<i32>} : memref<64x64xf32, #tpu.memory_space<vmem>>, vector<8x32xf32>,
    %c7_i32_25 = arith.constant 7 : i32
    %86 = arith.subi %c7_i32_25, %c1_i32 : i32
    %c8_i32_26 = arith.constant 8 : i32
    %87 = arith.muli %86, %c8_i32_26 : i32
    %88 = tpu.assume_multiple %87, 8 : i32
    %89 = vector.extract_strided_slice %82 {offsets = [0, 32], sizes = [8, 32], strides = [1, 1]} : vector<8x64xf32> to vector<8x32xf32>
    %90 = arith.index_cast %88 : i32 to index
    %c32_27 = arith.constant 32 : index
    %91 = vector.load %arg7[%90, %c32_27] : memref<64x64xf32, #tpu.memory_space<vmem>>, vector<8x32xf32>
    tpu.vector_store %arg7[%90, %c32_27], %89 {strides = array<i32>} : memref<64x64xf32, #tpu.memory_space<vmem>>, vector<8x32xf32>,
    %c2_i32 = arith.constant 2 : i32
    %c8_i32_28 = arith.constant 8 : i32
    %92 = arith.muli %c2_i32, %c8_i32_28 : i32
    %93 = tpu.assume_multiple %92, 8 : i32
    %94 = arith.index_cast %93 : i32 to index
    %c0_29 = arith.constant 0 : index
    %95 = vector.load %arg6[%94, %c0_29] : memref<64x256xf32, #tpu.memory_space<vmem>>, vector<8x256xf32>
    %96 = arith.truncf %82 : vector<8x64xf32> to vector<8x64xbf16>
    %cst_30 = arith.constant dense<0.000000e+00> : vector<8x256xf32>
    %97 = tpu.matmul %96, %23, %cst_30 {dimension_numbers = #tpu.dot_dimension_numbers<[1], [0], [0], [1], [0, 0, 1, 1], [], []>} : vector<8x64xbf16>, vector<64x256xbf16>, vector<8x256xf32> -> vector<8x256xf32>
    %98 = arith.addf %95, %97 : vector<8x256xf32>
    %99 = vector.extract_strided_slice %98 {offsets = [0, 0], sizes = [8, 192], strides = [1, 1]} : vector<8x256xf32> to vector<8x192xf32>
    %100 = arith.negf %99 : vector<8x192xf32>
    %101 = math.exp %100 : vector<8x192xf32>
    %cst_31 = arith.constant 1.000000e+00 : f32
    %102 = vector.broadcast %cst_31 : f32 to vector<8x192xf32>
    %103 = arith.addf %102, %101 : vector<8x192xf32>
    %104 = arith.divf %102, %103 : vector<8x192xf32>
    %105 = vector.extract_strided_slice %98 {offsets = [0, 192], sizes = [8, 64], strides = [1, 1]} : vector<8x256xf32> to vector<8x64xf32>
    %106 = math.tanh %105 : vector<8x64xf32>
    %107 = vector.extract_strided_slice %104 {offsets = [0, 0], sizes = [8, 64], strides = [1, 1]} : vector<8x192xf32> to vector<8x64xf32>
    %108 = vector.extract_strided_slice %104 {offsets = [0, 64], sizes = [8, 64], strides = [1, 1]} : vector<8x192xf32> to vector<8x64xf32>
    %109 = vector.extract_strided_slice %104 {offsets = [0, 128], sizes = [8, 64], strides = [1, 1]} : vector<8x192xf32> to vector<8x64xf32>
    %110 = arith.mulf %108, %80 : vector<8x64xf32>
    %111 = arith.mulf %107, %106 : vector<8x64xf32>
    %112 = arith.addf %110, %111 : vector<8x64xf32>
    %113 = math.tanh %112 : vector<8x64xf32>
    %114 = arith.mulf %109, %113 : vector<8x64xf32>
    %115 = vector.extract_strided_slice %114 {offsets = [0, 0], sizes = [8, 32], strides = [1, 1]} : vector<8x64xf32> to vector<8x32xf32>
    %116 = arith.index_cast %93 : i32 to index
    %c0_32 = arith.constant 0 : index
    %117 = vector.load %arg7[%116, %c0_32] : memref<64x64xf32, #tpu.memory_space<vmem>>, vector<8x32xf32>
    tpu.vector_store %arg7[%116, %c0_32], %115 {strides = array<i32>} : memref<64x64xf32, #tpu.memory_space<vmem>>, vector<8x32xf32>,
    %c7_i32_33 = arith.constant 7 : i32
    %118 = arith.subi %c7_i32_33, %c2_i32 : i32
    %c8_i32_34 = arith.constant 8 : i32
    %119 = arith.muli %118, %c8_i32_34 : i32
    %120 = tpu.assume_multiple %119, 8 : i32
    %121 = vector.extract_strided_slice %114 {offsets = [0, 32], sizes = [8, 32], strides = [1, 1]} : vector<8x64xf32> to vector<8x32xf32>
    %122 = arith.index_cast %120 : i32 to index
    %c32_35 = arith.constant 32 : index
    %123 = vector.load %arg7[%122, %c32_35] : memref<64x64xf32, #tpu.memory_space<vmem>>, vector<8x32xf32>
    tpu.vector_store %arg7[%122, %c32_35], %121 {strides = array<i32>} : memref<64x64xf32, #tpu.memory_space<vmem>>, vector<8x32xf32>,
    %c3_i32 = arith.constant 3 : i32
    %c8_i32_36 = arith.constant 8 : i32
    %124 = arith.muli %c3_i32, %c8_i32_36 : i32
    %125 = tpu.assume_multiple %124, 8 : i32
    %126 = arith.index_cast %125 : i32 to index
    %c0_37 = arith.constant 0 : index
    %127 = vector.load %arg6[%126, %c0_37] : memref<64x256xf32, #tpu.memory_space<vmem>>, vector<8x256xf32>
    %128 = arith.truncf %114 : vector<8x64xf32> to vector<8x64xbf16>
    %cst_38 = arith.constant dense<0.000000e+00> : vector<8x256xf32>
    %129 = tpu.matmul %128, %23, %cst_38 {dimension_numbers = #tpu.dot_dimension_numbers<[1], [0], [0], [1], [0, 0, 1, 1], [], []>} : vector<8x64xbf16>, vector<64x256xbf16>, vector<8x256xf32> -> vector<8x256xf32>
    %130 = arith.addf %127, %129 : vector<8x256xf32>
    %131 = vector.extract_strided_slice %130 {offsets = [0, 0], sizes = [8, 192], strides = [1, 1]} : vector<8x256xf32> to vector<8x192xf32>
    %132 = arith.negf %131 : vector<8x192xf32>
    %133 = math.exp %132 : vector<8x192xf32>
    %cst_39 = arith.constant 1.000000e+00 : f32
    %134 = vector.broadcast %cst_39 : f32 to vector<8x192xf32>
    %135 = arith.addf %134, %133 : vector<8x192xf32>
    %136 = arith.divf %134, %135 : vector<8x192xf32>
    %137 = vector.extract_strided_slice %130 {offsets = [0, 192], sizes = [8, 64], strides = [1, 1]} : vector<8x256xf32> to vector<8x64xf32>
    %138 = math.tanh %137 : vector<8x64xf32>
    %139 = vector.extract_strided_slice %136 {offsets = [0, 0], sizes = [8, 64], strides = [1, 1]} : vector<8x192xf32> to vector<8x64xf32>
    %140 = vector.extract_strided_slice %136 {offsets = [0, 64], sizes = [8, 64], strides = [1, 1]} : vector<8x192xf32> to vector<8x64xf32>
    %141 = vector.extract_strided_slice %136 {offsets = [0, 128], sizes = [8, 64], strides = [1, 1]} : vector<8x192xf32> to vector<8x64xf32>
    %142 = arith.mulf %140, %112 : vector<8x64xf32>
    %143 = arith.mulf %139, %138 : vector<8x64xf32>
    %144 = arith.addf %142, %143 : vector<8x64xf32>
    %145 = math.tanh %144 : vector<8x64xf32>
    %146 = arith.mulf %141, %145 : vector<8x64xf32>
    %147 = vector.extract_strided_slice %146 {offsets = [0, 0], sizes = [8, 32], strides = [1, 1]} : vector<8x64xf32> to vector<8x32xf32>
    %148 = arith.index_cast %125 : i32 to index
    %c0_40 = arith.constant 0 : index
    %149 = vector.load %arg7[%148, %c0_40] : memref<64x64xf32, #tpu.memory_space<vmem>>, vector<8x32xf32>
    tpu.vector_store %arg7[%148, %c0_40], %147 {strides = array<i32>} : memref<64x64xf32, #tpu.memory_space<vmem>>, vector<8x32xf32>,
    %c7_i32_41 = arith.constant 7 : i32
    %150 = arith.subi %c7_i32_41, %c3_i32 : i32
    %c8_i32_42 = arith.constant 8 : i32
    %151 = arith.muli %150, %c8_i32_42 : i32
    %152 = tpu.assume_multiple %151, 8 : i32
    %153 = vector.extract_strided_slice %146 {offsets = [0, 32], sizes = [8, 32], strides = [1, 1]} : vector<8x64xf32> to vector<8x32xf32>
    %154 = arith.index_cast %152 : i32 to index
    %c32_43 = arith.constant 32 : index
    %155 = vector.load %arg7[%154, %c32_43] : memref<64x64xf32, #tpu.memory_space<vmem>>, vector<8x32xf32>
    tpu.vector_store %arg7[%154, %c32_43], %153 {strides = array<i32>} : memref<64x64xf32, #tpu.memory_space<vmem>>, vector<8x32xf32>,
    %c4_i32 = arith.constant 4 : i32
    %c8_i32_44 = arith.constant 8 : i32
    %156 = arith.muli %c4_i32, %c8_i32_44 : i32
    %157 = tpu.assume_multiple %156, 8 : i32
    %158 = arith.index_cast %157 : i32 to index
    %c0_45 = arith.constant 0 : index
    %159 = vector.load %arg6[%158, %c0_45] : memref<64x256xf32, #tpu.memory_space<vmem>>, vector<8x256xf32>
    %160 = arith.truncf %146 : vector<8x64xf32> to vector<8x64xbf16>
    %cst_46 = arith.constant dense<0.000000e+00> : vector<8x256xf32>
    %161 = tpu.matmul %160, %23, %cst_46 {dimension_numbers = #tpu.dot_dimension_numbers<[1], [0], [0], [1], [0, 0, 1, 1], [], []>} : vector<8x64xbf16>, vector<64x256xbf16>, vector<8x256xf32> -> vector<8x256xf32>
    %162 = arith.addf %159, %161 : vector<8x256xf32>
    %163 = vector.extract_strided_slice %162 {offsets = [0, 0], sizes = [8, 192], strides = [1, 1]} : vector<8x256xf32> to vector<8x192xf32>
    %164 = arith.negf %163 : vector<8x192xf32>
    %165 = math.exp %164 : vector<8x192xf32>
    %cst_47 = arith.constant 1.000000e+00 : f32
    %166 = vector.broadcast %cst_47 : f32 to vector<8x192xf32>
    %167 = arith.addf %166, %165 : vector<8x192xf32>
    %168 = arith.divf %166, %167 : vector<8x192xf32>
    %169 = vector.extract_strided_slice %162 {offsets = [0, 192], sizes = [8, 64], strides = [1, 1]} : vector<8x256xf32> to vector<8x64xf32>
    %170 = math.tanh %169 : vector<8x64xf32>
    %171 = vector.extract_strided_slice %168 {offsets = [0, 0], sizes = [8, 64], strides = [1, 1]} : vector<8x192xf32> to vector<8x64xf32>
    %172 = vector.extract_strided_slice %168 {offsets = [0, 64], sizes = [8, 64], strides = [1, 1]} : vector<8x192xf32> to vector<8x64xf32>
    %173 = vector.extract_strided_slice %168 {offsets = [0, 128], sizes = [8, 64], strides = [1, 1]} : vector<8x192xf32> to vector<8x64xf32>
    %174 = arith.mulf %172, %144 : vector<8x64xf32>
    %175 = arith.mulf %171, %170 : vector<8x64xf32>
    %176 = arith.addf %174, %175 : vector<8x64xf32>
    %177 = math.tanh %176 : vector<8x64xf32>
    %178 = arith.mulf %173, %177 : vector<8x64xf32>
    %179 = vector.extract_strided_slice %178 {offsets = [0, 0], sizes = [8, 32], strides = [1, 1]} : vector<8x64xf32> to vector<8x32xf32>
    %180 = arith.index_cast %157 : i32 to index
    %c0_48 = arith.constant 0 : index
    %181 = vector.load %arg7[%180, %c0_48] : memref<64x64xf32, #tpu.memory_space<vmem>>, vector<8x32xf32>
    tpu.vector_store %arg7[%180, %c0_48], %179 {strides = array<i32>} : memref<64x64xf32, #tpu.memory_space<vmem>>, vector<8x32xf32>,
    %c7_i32_49 = arith.constant 7 : i32
    %182 = arith.subi %c7_i32_49, %c4_i32 : i32
    %c8_i32_50 = arith.constant 8 : i32
    %183 = arith.muli %182, %c8_i32_50 : i32
    %184 = tpu.assume_multiple %183, 8 : i32
    %185 = vector.extract_strided_slice %178 {offsets = [0, 32], sizes = [8, 32], strides = [1, 1]} : vector<8x64xf32> to vector<8x32xf32>
    %186 = arith.index_cast %184 : i32 to index
    %c32_51 = arith.constant 32 : index
    %187 = vector.load %arg7[%186, %c32_51] : memref<64x64xf32, #tpu.memory_space<vmem>>, vector<8x32xf32>
    tpu.vector_store %arg7[%186, %c32_51], %185 {strides = array<i32>} : memref<64x64xf32, #tpu.memory_space<vmem>>, vector<8x32xf32>,
    %c5_i32 = arith.constant 5 : i32
    %c8_i32_52 = arith.constant 8 : i32
    %188 = arith.muli %c5_i32, %c8_i32_52 : i32
    %189 = tpu.assume_multiple %188, 8 : i32
    %190 = arith.index_cast %189 : i32 to index
    %c0_53 = arith.constant 0 : index
    %191 = vector.load %arg6[%190, %c0_53] : memref<64x256xf32, #tpu.memory_space<vmem>>, vector<8x256xf32>
    %192 = arith.truncf %178 : vector<8x64xf32> to vector<8x64xbf16>
    %cst_54 = arith.constant dense<0.000000e+00> : vector<8x256xf32>
    %193 = tpu.matmul %192, %23, %cst_54 {dimension_numbers = #tpu.dot_dimension_numbers<[1], [0], [0], [1], [0, 0, 1, 1], [], []>} : vector<8x64xbf16>, vector<64x256xbf16>, vector<8x256xf32> -> vector<8x256xf32>
    %194 = arith.addf %191, %193 : vector<8x256xf32>
    %195 = vector.extract_strided_slice %194 {offsets = [0, 0], sizes = [8, 192], strides = [1, 1]} : vector<8x256xf32> to vector<8x192xf32>
    %196 = arith.negf %195 : vector<8x192xf32>
    %197 = math.exp %196 : vector<8x192xf32>
    %cst_55 = arith.constant 1.000000e+00 : f32
    %198 = vector.broadcast %cst_55 : f32 to vector<8x192xf32>
    %199 = arith.addf %198, %197 : vector<8x192xf32>
    %200 = arith.divf %198, %199 : vector<8x192xf32>
    %201 = vector.extract_strided_slice %194 {offsets = [0, 192], sizes = [8, 64], strides = [1, 1]} : vector<8x256xf32> to vector<8x64xf32>
    %202 = math.tanh %201 : vector<8x64xf32>
    %203 = vector.extract_strided_slice %200 {offsets = [0, 0], sizes = [8, 64], strides = [1, 1]} : vector<8x192xf32> to vector<8x64xf32>
    %204 = vector.extract_strided_slice %200 {offsets = [0, 64], sizes = [8, 64], strides = [1, 1]} : vector<8x192xf32> to vector<8x64xf32>
    %205 = vector.extract_strided_slice %200 {offsets = [0, 128], sizes = [8, 64], strides = [1, 1]} : vector<8x192xf32> to vector<8x64xf32>
    %206 = arith.mulf %204, %176 : vector<8x64xf32>
    %207 = arith.mulf %203, %202 : vector<8x64xf32>
    %208 = arith.addf %206, %207 : vector<8x64xf32>
    %209 = math.tanh %208 : vector<8x64xf32>
    %210 = arith.mulf %205, %209 : vector<8x64xf32>
    %211 = vector.extract_strided_slice %210 {offsets = [0, 0], sizes = [8, 32], strides = [1, 1]} : vector<8x64xf32> to vector<8x32xf32>
    %212 = arith.index_cast %189 : i32 to index
    %c0_56 = arith.constant 0 : index
    %213 = vector.load %arg7[%212, %c0_56] : memref<64x64xf32, #tpu.memory_space<vmem>>, vector<8x32xf32>
    tpu.vector_store %arg7[%212, %c0_56], %211 {strides = array<i32>} : memref<64x64xf32, #tpu.memory_space<vmem>>, vector<8x32xf32>,
    %c7_i32_57 = arith.constant 7 : i32
    %214 = arith.subi %c7_i32_57, %c5_i32 : i32
    %c8_i32_58 = arith.constant 8 : i32
    %215 = arith.muli %214, %c8_i32_58 : i32
    %216 = tpu.assume_multiple %215, 8 : i32
    %217 = vector.extract_strided_slice %210 {offsets = [0, 32], sizes = [8, 32], strides = [1, 1]} : vector<8x64xf32> to vector<8x32xf32>
    %218 = arith.index_cast %216 : i32 to index
    %c32_59 = arith.constant 32 : index
    %219 = vector.load %arg7[%218, %c32_59] : memref<64x64xf32, #tpu.memory_space<vmem>>, vector<8x32xf32>
    tpu.vector_store %arg7[%218, %c32_59], %217 {strides = array<i32>} : memref<64x64xf32, #tpu.memory_space<vmem>>, vector<8x32xf32>,
    %c6_i32 = arith.constant 6 : i32
    %c8_i32_60 = arith.constant 8 : i32
    %220 = arith.muli %c6_i32, %c8_i32_60 : i32
    %221 = tpu.assume_multiple %220, 8 : i32
    %222 = arith.index_cast %221 : i32 to index
    %c0_61 = arith.constant 0 : index
    %223 = vector.load %arg6[%222, %c0_61] : memref<64x256xf32, #tpu.memory_space<vmem>>, vector<8x256xf32>
    %224 = arith.truncf %210 : vector<8x64xf32> to vector<8x64xbf16>
    %cst_62 = arith.constant dense<0.000000e+00> : vector<8x256xf32>
    %225 = tpu.matmul %224, %23, %cst_62 {dimension_numbers = #tpu.dot_dimension_numbers<[1], [0], [0], [1], [0, 0, 1, 1], [], []>} : vector<8x64xbf16>, vector<64x256xbf16>, vector<8x256xf32> -> vector<8x256xf32>
    %226 = arith.addf %223, %225 : vector<8x256xf32>
    %227 = vector.extract_strided_slice %226 {offsets = [0, 0], sizes = [8, 192], strides = [1, 1]} : vector<8x256xf32> to vector<8x192xf32>
    %228 = arith.negf %227 : vector<8x192xf32>
    %229 = math.exp %228 : vector<8x192xf32>
    %cst_63 = arith.constant 1.000000e+00 : f32
    %230 = vector.broadcast %cst_63 : f32 to vector<8x192xf32>
    %231 = arith.addf %230, %229 : vector<8x192xf32>
    %232 = arith.divf %230, %231 : vector<8x192xf32>
    %233 = vector.extract_strided_slice %226 {offsets = [0, 192], sizes = [8, 64], strides = [1, 1]} : vector<8x256xf32> to vector<8x64xf32>
    %234 = math.tanh %233 : vector<8x64xf32>
    %235 = vector.extract_strided_slice %232 {offsets = [0, 0], sizes = [8, 64], strides = [1, 1]} : vector<8x192xf32> to vector<8x64xf32>
    %236 = vector.extract_strided_slice %232 {offsets = [0, 64], sizes = [8, 64], strides = [1, 1]} : vector<8x192xf32> to vector<8x64xf32>
    %237 = vector.extract_strided_slice %232 {offsets = [0, 128], sizes = [8, 64], strides = [1, 1]} : vector<8x192xf32> to vector<8x64xf32>
    %238 = arith.mulf %236, %208 : vector<8x64xf32>
    %239 = arith.mulf %235, %234 : vector<8x64xf32>
    %240 = arith.addf %238, %239 : vector<8x64xf32>
    %241 = math.tanh %240 : vector<8x64xf32>
    %242 = arith.mulf %237, %241 : vector<8x64xf32>
    %243 = vector.extract_strided_slice %242 {offsets = [0, 0], sizes = [8, 32], strides = [1, 1]} : vector<8x64xf32> to vector<8x32xf32>
    %244 = arith.index_cast %221 : i32 to index
    %c0_64 = arith.constant 0 : index
    %245 = vector.load %arg7[%244, %c0_64] : memref<64x64xf32, #tpu.memory_space<vmem>>, vector<8x32xf32>
    tpu.vector_store %arg7[%244, %c0_64], %243 {strides = array<i32>} : memref<64x64xf32, #tpu.memory_space<vmem>>, vector<8x32xf32>,
    %c7_i32_65 = arith.constant 7 : i32
    %246 = arith.subi %c7_i32_65, %c6_i32 : i32
    %c8_i32_66 = arith.constant 8 : i32
    %247 = arith.muli %246, %c8_i32_66 : i32
    %248 = tpu.assume_multiple %247, 8 : i32
    %249 = vector.extract_strided_slice %242 {offsets = [0, 32], sizes = [8, 32], strides = [1, 1]} : vector<8x64xf32> to vector<8x32xf32>
    %250 = arith.index_cast %248 : i32 to index
    %c32_67 = arith.constant 32 : index
    %251 = vector.load %arg7[%250, %c32_67] : memref<64x64xf32, #tpu.memory_space<vmem>>, vector<8x32xf32>
    tpu.vector_store %arg7[%250, %c32_67], %249 {strides = array<i32>} : memref<64x64xf32, #tpu.memory_space<vmem>>, vector<8x32xf32>,
    %c7_i32_68 = arith.constant 7 : i32
    %c8_i32_69 = arith.constant 8 : i32
    %252 = arith.muli %c7_i32_68, %c8_i32_69 : i32
    %253 = tpu.assume_multiple %252, 8 : i32
    %254 = arith.index_cast %253 : i32 to index
    %c0_70 = arith.constant 0 : index
    %255 = vector.load %arg6[%254, %c0_70] : memref<64x256xf32, #tpu.memory_space<vmem>>, vector<8x256xf32>
    %256 = arith.truncf %242 : vector<8x64xf32> to vector<8x64xbf16>
    %cst_71 = arith.constant dense<0.000000e+00> : vector<8x256xf32>
    %257 = tpu.matmul %256, %23, %cst_71 {dimension_numbers = #tpu.dot_dimension_numbers<[1], [0], [0], [1], [0, 0, 1, 1], [], []>} : vector<8x64xbf16>, vector<64x256xbf16>, vector<8x256xf32> -> vector<8x256xf32>
    %258 = arith.addf %255, %257 : vector<8x256xf32>
    %259 = vector.extract_strided_slice %258 {offsets = [0, 0], sizes = [8, 192], strides = [1, 1]} : vector<8x256xf32> to vector<8x192xf32>
    %260 = arith.negf %259 : vector<8x192xf32>
    %261 = math.exp %260 : vector<8x192xf32>
    %cst_72 = arith.constant 1.000000e+00 : f32
    %262 = vector.broadcast %cst_72 : f32 to vector<8x192xf32>
    %263 = arith.addf %262, %261 : vector<8x192xf32>
    %264 = arith.divf %262, %263 : vector<8x192xf32>
    %265 = vector.extract_strided_slice %258 {offsets = [0, 192], sizes = [8, 64], strides = [1, 1]} : vector<8x256xf32> to vector<8x64xf32>
    %266 = math.tanh %265 : vector<8x64xf32>
    %267 = vector.extract_strided_slice %264 {offsets = [0, 0], sizes = [8, 64], strides = [1, 1]} : vector<8x192xf32> to vector<8x64xf32>
    %268 = vector.extract_strided_slice %264 {offsets = [0, 64], sizes = [8, 64], strides = [1, 1]} : vector<8x192xf32> to vector<8x64xf32>
    %269 = vector.extract_strided_slice %264 {offsets = [0, 128], sizes = [8, 64], strides = [1, 1]} : vector<8x192xf32> to vector<8x64xf32>
    %270 = arith.mulf %268, %240 : vector<8x64xf32>
    %271 = arith.mulf %267, %266 : vector<8x64xf32>
    %272 = arith.addf %270, %271 : vector<8x64xf32>
    %273 = math.tanh %272 : vector<8x64xf32>
    %274 = arith.mulf %269, %273 : vector<8x64xf32>
    %275 = vector.extract_strided_slice %274 {offsets = [0, 0], sizes = [8, 32], strides = [1, 1]} : vector<8x64xf32> to vector<8x32xf32>
    %276 = arith.index_cast %253 : i32 to index
    %c0_73 = arith.constant 0 : index
    %277 = vector.load %arg7[%276, %c0_73] : memref<64x64xf32, #tpu.memory_space<vmem>>, vector<8x32xf32>
    tpu.vector_store %arg7[%276, %c0_73], %275 {strides = array<i32>} : memref<64x64xf32, #tpu.memory_space<vmem>>, vector<8x32xf32>,
    %c7_i32_74 = arith.constant 7 : i32
    %278 = arith.subi %c7_i32_74, %c7_i32_68 : i32
    %c8_i32_75 = arith.constant 8 : i32
    %279 = arith.muli %278, %c8_i32_75 : i32
    %280 = tpu.assume_multiple %279, 8 : i32
    %281 = vector.extract_strided_slice %274 {offsets = [0, 32], sizes = [8, 32], strides = [1, 1]} : vector<8x64xf32> to vector<8x32xf32>
    %282 = arith.index_cast %280 : i32 to index
    %c32_76 = arith.constant 32 : index
    %283 = vector.load %arg7[%282, %c32_76] : memref<64x64xf32, #tpu.memory_space<vmem>>, vector<8x32xf32>
    tpu.vector_store %arg7[%282, %c32_76], %281 {strides = array<i32>} : memref<64x64xf32, #tpu.memory_space<vmem>>, vector<8x32xf32>,
    %c8_i32_77 = arith.constant 8 : i32
    %284 = vector.extract_strided_slice %274 {offsets = [0, 0], sizes = [2, 32], strides = [1, 1]} : vector<8x64xf32> to vector<2x32xf32>
    %c0_78 = arith.constant 0 : index
    %c0_79 = arith.constant 0 : index
    %c0_80 = arith.constant 0 : index
    %285 = vector.load %arg5[%c0_78, %c0_79, %c0_80] : memref<4x2x32xf32, #tpu.memory_space<vmem>>, vector<1x2x32xf32>
    %286 = vector.shape_cast %285 : vector<1x2x32xf32> to vector<2x32xf32>
    %287 = vector.shape_cast %284 : vector<2x32xf32> to vector<1x2x32xf32>
    tpu.vector_store %arg5[%c0_78, %c0_79, %c0_80], %287 {strides = array<i32>} : memref<4x2x32xf32, #tpu.memory_space<vmem>>, vector<1x2x32xf32>,
    %288 = vector.extract_strided_slice %274 {offsets = [0, 32], sizes = [2, 32], strides = [1, 1]} : vector<8x64xf32> to vector<2x32xf32>
    %c1_81 = arith.constant 1 : index
    %c0_82 = arith.constant 0 : index
    %c0_83 = arith.constant 0 : index
    %289 = vector.load %arg5[%c1_81, %c0_82, %c0_83] : memref<4x2x32xf32, #tpu.memory_space<vmem>>, vector<1x2x32xf32>
    %290 = vector.shape_cast %289 : vector<1x2x32xf32> to vector<2x32xf32>
    %291 = vector.shape_cast %288 : vector<2x32xf32> to vector<1x2x32xf32>
    tpu.vector_store %arg5[%c1_81, %c0_82, %c0_83], %291 {strides = array<i32>} : memref<4x2x32xf32, #tpu.memory_space<vmem>>, vector<1x2x32xf32>,
    %292 = vector.extract_strided_slice %272 {offsets = [0, 0], sizes = [2, 32], strides = [1, 1]} : vector<8x64xf32> to vector<2x32xf32>
    %c2 = arith.constant 2 : index
    %c0_84 = arith.constant 0 : index
    %c0_85 = arith.constant 0 : index
    %293 = vector.load %arg5[%c2, %c0_84, %c0_85] : memref<4x2x32xf32, #tpu.memory_space<vmem>>, vector<1x2x32xf32>
    %294 = vector.shape_cast %293 : vector<1x2x32xf32> to vector<2x32xf32>
    %295 = vector.shape_cast %292 : vector<2x32xf32> to vector<1x2x32xf32>
    tpu.vector_store %arg5[%c2, %c0_84, %c0_85], %295 {strides = array<i32>} : memref<4x2x32xf32, #tpu.memory_space<vmem>>, vector<1x2x32xf32>,
    %296 = vector.extract_strided_slice %272 {offsets = [0, 32], sizes = [2, 32], strides = [1, 1]} : vector<8x64xf32> to vector<2x32xf32>
    %c3 = arith.constant 3 : index
    %c0_86 = arith.constant 0 : index
    %c0_87 = arith.constant 0 : index
    %297 = vector.load %arg5[%c3, %c0_86, %c0_87] : memref<4x2x32xf32, #tpu.memory_space<vmem>>, vector<1x2x32xf32>
    %298 = vector.shape_cast %297 : vector<1x2x32xf32> to vector<2x32xf32>
    %299 = vector.shape_cast %296 : vector<2x32xf32> to vector<1x2x32xf32>
    tpu.vector_store %arg5[%c3, %c0_86, %c0_87], %299 {strides = array<i32>} : memref<4x2x32xf32, #tpu.memory_space<vmem>>, vector<1x2x32xf32>,
    %c256 = arith.constant 256 : index
    %c0_88 = arith.constant 0 : index
    %300 = vector.load %arg2[%c256, %c0_88] : memref<320x256xbf16, #tpu.memory_space<vmem>>, vector<64x128xbf16>
    %c0_89 = arith.constant 0 : index
    %c0_90 = arith.constant 0 : index
    %301 = vector.load %arg7[%c0_89, %c0_90] : memref<64x64xf32, #tpu.memory_space<vmem>>, vector<64x64xf32>
    %302 = arith.truncf %301 : vector<64x64xf32> to vector<64x64xbf16>
    %cst_91 = arith.constant dense<0.000000e+00> : vector<64x128xf32>
    %303 = tpu.matmul %302, %300, %cst_91 {dimension_numbers = #tpu.dot_dimension_numbers<[1], [0], [0], [1], [0, 0, 1, 1], [], []>} : vector<64x64xbf16>, vector<64x128xbf16>, vector<64x128xf32> -> vector<64x128xf32>
    %c1_92 = arith.constant 1 : index
    %c0_93 = arith.constant 0 : index
    %304 = vector.load %arg3[%c1_92, %c0_93] : memref<2x256xf32, #tpu.memory_space<vmem>>, vector<1x128xf32>
    %305 = vector.broadcast %304 : vector<1x128xf32> to vector<64x128xf32>
    %306 = arith.addf %303, %305 : vector<64x128xf32>
    %c0_94 = arith.constant 0 : index
    %c0_95 = arith.constant 0 : index
    %307 = vector.load %arg4[%c0_94, %c0_95] : memref<64x128xf32, #tpu.memory_space<vmem>>, vector<64x128xf32>
    tpu.vector_store %arg4[%c0_94, %c0_95], %306 {strides = array<i32>} : memref<64x128xf32, #tpu.memory_space<vmem>>, vector<64x128xf32>,
    return
  }
}

</mosaic_0001>

<llo_original>
// kernel: rnnlm_forward.1
$region0: #{rnnlm_forward.1}
  #allocation0 [shape = 'u32[]', space=smem, size = 0x4, offset = 0x4, fixed_abs, tag = 'smem constant byte address 0x4 - core index']
  #allocation1 [shape = 'u32[144,128]{1,0:T(1,128)}', space=vmem, size = 0x12000, scoped, tag = 'internal scratch']
  #allocation2 [shape = 'f32[64,256]{1,0:T(8,128)}', space=vmem, size = 0x10000, scoped, tag = 'scratch operand']
  #allocation3 [shape = 'f32[64,64]{1,0:T(8,128)}', space=vmem, size = 0x8000, scoped, tag = 'scratch operand']
  %s0 = inlined_call_operand.vmem [shape: s32[64,2], index: 0, kind: input, shape index: {}]
  %s1 = inlined_call_operand.vmem [shape: f32[2,8,64], index: 1, kind: input, shape index: {}]
  %s2 = inlined_call_operand.hbm [shape: bf16[320,256], index: 2, kind: input, shape index: {}]
  %s3 = inlined_call_operand.vmem [shape: f32[2,256], index: 3, kind: input, shape index: {}]
  %s4 = inlined_call_operand.vmem [shape: f32[64,128], index: 4, kind: output, shape index: {0}]
  %s5 = inlined_call_operand.vmem [shape: f32[4,2,32], index: 5, kind: output, shape index: {1}]
  %6 = xla_tuple %s4, %s5
  %s7 = sld [smem:[#allocation0]]
  $region38: #{rnnlm_forward.1} parent=0
    _
  %s9 = ssub.s32 1, %s7
  %s10 = scalar_select 0, %s9, %s7
  $region1: #{rnnlm_forward.1} parent=0
    #allocation4 [shape = 'u8[163840]{0}', space=vmem, size = 0x28000, scoped, tag = 'input window, operand 2, single buffered']
    #allocation5 [shape = 's32[1]{0}', space=sflag, size = 0x4, scoped, tag = 'scoped memory for rnnlm_forward.1']
    %11 = vsyncpa [#allocation5], 0
    // Predicated region
    $region2: #{rnnlm_forward.1} parent=1 // pred_check
      _
    $region3: #{rnnlm_forward.1} parent=1 // pred_check_branch
      %13 = sbr.rel (0) target = $region5
    $region4: #{rnnlm_forward.1} parent=1 // pred_region
      _
    $region5: #{rnnlm_forward.1} parent=1 // pred_fallthru
      _
    // Predicated region
    $region6: #{rnnlm_forward.1} parent=1 // pred_check
      _
    $region7: #{rnnlm_forward.1} parent=1 // pred_check_branch
      %15 = sbr.rel (0) target = $region9
    $region8: #{rnnlm_forward.1} parent=1 // pred_region
      _
    $region9: #{rnnlm_forward.1} parent=1 // pred_fallthru
      _
    // Predicated region
    $region10: #{rnnlm_forward.1} parent=1 // pred_check
      _
    $region11: #{rnnlm_forward.1} parent=1 // pred_check_branch
      %17 = sbr.rel (0) target = $region13
    $region12: #{rnnlm_forward.1} parent=1 // pred_region
      %s19 = ssub.s32 5120, 5120
      %20 = vsyncadd [#allocation5], %s19
      %s21 = sshll.u32 [#allocation4], 4
      %s22 = int_to_ptr.vmem [resolvable:$true] %s21
      %27 = dma.hbm_to_vmem [thread:$0]  %s2, 5120, %s22, [#allocation5], 128, 128, 8
    $region13: #{rnnlm_forward.1} parent=1 // pred_fallthru
      _
    // Predicated region
    $region14: #{rnnlm_forward.1} parent=1 // pred_check
      _
    $region15: #{rnnlm_forward.1} parent=1 // pred_check_branch
      %29 = sbr.rel (0) target = $region17
    $region16: #{rnnlm_forward.1} parent=1 // pred_region
      _
    $region17: #{rnnlm_forward.1} parent=1 // pred_fallthru
      _
    // Predicated region
    $region18: #{rnnlm_forward.1} parent=1 // pred_check
      _
    $region19: #{rnnlm_forward.1} parent=1 // pred_check_branch
      %31 = sbr.rel (0) target = $region21
    $region20: #{rnnlm_forward.1} parent=1 // pred_region
      %32 = dma.done [#allocation5], 5120
    $region21: #{rnnlm_forward.1} parent=1 // pred_fallthru
      _
    %v34 = vld [vmem:[%s0] sm:$0xff]
    %v35 = vld [vmem:[%s0 + $0x8] sm:$0xff]
    %v36 = vld [vmem:[%s0 + $0x10] sm:$0xff]
    %v37 = vld [vmem:[%s0 + $0x18] sm:$0xff]
    %v38 = vld [vmem:[%s0 + $0x20] sm:$0xff]
    %v39 = vld [vmem:[%s0 + $0x28] sm:$0xff]
    %v40 = vld [vmem:[%s0 + $0x30] sm:$0xff]
    %v41 = vld [vmem:[%s0 + $0x38] sm:$0xff]
    %v42 = vlaneseq
    %v43 = vand.u32 %v42, 127
    %44 = vset.pattern.permute.xlu0 0
    %45 = vperm.xlu0 %44, %v34
    %v46 = vpop.permute.xlu0 %45
    %47 = vset.pattern.permute.xlu0 0
    %48 = vperm.xlu0 %47, %v35
    %v49 = vpop.permute.xlu0 %48
    %50 = vset.pattern.permute.xlu0 0
    %51 = vperm.xlu0 %50, %v36
    %v52 = vpop.permute.xlu0 %51
    %53 = vset.pattern.permute.xlu0 0
    %54 = vperm.xlu0 %53, %v37
    %v55 = vpop.permute.xlu0 %54
    %56 = vset.pattern.permute.xlu0 0
    %57 = vperm.xlu0 %56, %v38
    %v58 = vpop.permute.xlu0 %57
    %59 = vset.pattern.permute.xlu0 0
    %60 = vperm.xlu0 %59, %v39
    %v61 = vpop.permute.xlu0 %60
    %62 = vset.pattern.permute.xlu0 0
    %63 = vperm.xlu0 %62, %v40
    %v64 = vpop.permute.xlu0 %63
    %65 = vset.pattern.permute.xlu0 0
    %66 = vperm.xlu0 %65, %v41
    %v67 = vpop.permute.xlu0 %66
    %vm68 = vcmp.eq.s32.totalorder %v43, %v46
    %vm69 = vcmp.eq.s32.totalorder %v43, %v49
    %vm70 = vcmp.eq.s32.totalorder %v43, %v52
    %vm71 = vcmp.eq.s32.totalorder %v43, %v55
    %vm72 = vcmp.eq.s32.totalorder %v43, %v58
    %vm73 = vcmp.eq.s32.totalorder %v43, %v61
    %vm74 = vcmp.eq.s32.totalorder %v43, %v64
    %vm75 = vcmp.eq.s32.totalorder %v43, %v67
    %v76 = vsel %vm68, 1, 0
    %v77 = vsel %vm69, 1, 0
    %v78 = vsel %vm70, 1, 0
    %v79 = vsel %vm71, 1, 0
    %v80 = vsel %vm72, 1, 0
    %v81 = vsel %vm73, 1, 0
    %v82 = vsel %vm74, 1, 0
    %v83 = vsel %vm75, 1, 0
    %v84 = vcvt.s32.f32 %v76
    %v85 = vcvt.s32.f32 %v77
    %v86 = vcvt.s32.f32 %v78
    %v87 = vcvt.s32.f32 %v79
    %v88 = vcvt.s32.f32 %v80
    %v89 = vcvt.s32.f32 %v81
    %v90 = vcvt.s32.f32 %v82
    %v91 = vcvt.s32.f32 %v83
    %92 = vset.pattern.permute.xlu0 1
    %93 = vperm.xlu0 %92, %v34
    %v94 = vpop.permute.xlu0 %93
    %95 = vset.pattern.permute.xlu0 1
    %96 = vperm.xlu0 %95, %v35
    %v97 = vpop.permute.xlu0 %96
    %98 = vset.pattern.permute.xlu0 1
    %99 = vperm.xlu0 %98, %v36
    %v100 = vpop.permute.xlu0 %99
    %101 = vset.pattern.permute.xlu0 1
    %102 = vperm.xlu0 %101, %v37
    %v103 = vpop.permute.xlu0 %102
    %104 = vset.pattern.permute.xlu0 1
    %105 = vperm.xlu0 %104, %v38
    %v106 = vpop.permute.xlu0 %105
    %107 = vset.pattern.permute.xlu0 1
    %108 = vperm.xlu0 %107, %v39
    %v109 = vpop.permute.xlu0 %108
    %110 = vset.pattern.permute.xlu0 1
    %111 = vperm.xlu0 %110, %v40
    %v112 = vpop.permute.xlu0 %111
    %113 = vset.pattern.permute.xlu0 1
    %114 = vperm.xlu0 %113, %v41
    %v115 = vpop.permute.xlu0 %114
    %vm116 = vcmp.eq.s32.totalorder %v43, %v94
    %vm117 = vcmp.eq.s32.totalorder %v43, %v97
    %vm118 = vcmp.eq.s32.totalorder %v43, %v100
    %vm119 = vcmp.eq.s32.totalorder %v43, %v103
    %vm120 = vcmp.eq.s32.totalorder %v43, %v106
    %vm121 = vcmp.eq.s32.totalorder %v43, %v109
    %vm122 = vcmp.eq.s32.totalorder %v43, %v112
    %vm123 = vcmp.eq.s32.totalorder %v43, %v115
    %v124 = vsel %vm116, 1, 0
    %v125 = vsel %vm117, 1, 0
    %v126 = vsel %vm118, 1, 0
    %v127 = vsel %vm119, 1, 0
    %v128 = vsel %vm120, 1, 0
    %v129 = vsel %vm121, 1, 0
    %v130 = vsel %vm122, 1, 0
    %v131 = vsel %vm123, 1, 0
    %v132 = vcvt.s32.f32 %v124
    %v133 = vcvt.s32.f32 %v125
    %v134 = vcvt.s32.f32 %v126
    %v135 = vcvt.s32.f32 %v127
    %v136 = vcvt.s32.f32 %v128
    %v137 = vcvt.s32.f32 %v129
    %v138 = vcvt.s32.f32 %v130
    %v139 = vcvt.s32.f32 %v131
    %v140 = vadd.f32 %v84, %v132
    %v141 = vadd.f32 %v85, %v133
    %v142 = vadd.f32 %v86, %v134
    %v143 = vadd.f32 %v87, %v135
    %v144 = vadd.f32 %v88, %v136
    %v145 = vadd.f32 %v89, %v137
    %v146 = vadd.f32 %v90, %v138
    %v147 = vadd.f32 %v91, %v139
    %v148 = vpack.c.bf16 %v141, %v140
    %v149 = vpack.c.bf16 %v143, %v142
    %v150 = vpack.c.bf16 %v145, %v144
    %v151 = vpack.c.bf16 %v147, %v146
    %v152 = vld [vmem:[#allocation4] sm:$0xf]
    %v153 = vld [vmem:[#allocation4 + $0x8] sm:$0xf]
    %v154 = vld [vmem:[#allocation4 + $0x10] sm:$0xf]
    %v155 = vld [vmem:[#allocation4 + $0x18] sm:$0xf]
    %v156 = vld [vmem:[#allocation4 + $0x20] sm:$0xf]
    %v157 = vld [vmem:[#allocation4 + $0x28] sm:$0xf]
    %v158 = vld [vmem:[#allocation4 + $0x30] sm:$0xf]
    %v159 = vld [vmem:[#allocation4 + $0x38] sm:$0xf]
    %v160 = vld [vmem:[#allocation4 + $0x40] sm:$0xf]
    %v161 = vld [vmem:[#allocation4 + $0x48] sm:$0xf]
    %v162 = vld [vmem:[#allocation4 + $0x50] sm:$0xf]
    %v163 = vld [vmem:[#allocation4 + $0x58] sm:$0xf]
    %v164 = vld [vmem:[#allocation4 + $0x60] sm:$0xf]
    %v165 = vld [vmem:[#allocation4 + $0x68] sm:$0xf]
    %v166 = vld [vmem:[#allocation4 + $0x70] sm:$0xf]
    %v167 = vld [vmem:[#allocation4 + $0x78] sm:$0xf]
    %v184 = vunpack.c.l.b16 %v152
    %v185 = vunpack.c.l.b16 %v153
    %v186 = vunpack.c.l.b16 %v154
    %v187 = vunpack.c.l.b16 %v155
    %v188 = vunpack.c.l.b16 %v156
    %v189 = vunpack.c.l.b16 %v157
    %v190 = vunpack.c.l.b16 %v158
    %v191 = vunpack.c.l.b16 %v159
    %v192 = vunpack.c.l.b16 %v160
    %v193 = vunpack.c.l.b16 %v161
    %v194 = vunpack.c.l.b16 %v162
    %v195 = vunpack.c.l.b16 %v163
    %v196 = vunpack.c.l.b16 %v164
    %v197 = vunpack.c.l.b16 %v165
    %v198 = vunpack.c.l.b16 %v166
    %v199 = vunpack.c.l.b16 %v167
    %v200 = vpack.c.b16 %v185, %v184
    %v201 = vpack.c.b16 %v187, %v186
    %v202 = vpack.c.b16 %v189, %v188
    %v203 = vpack.c.b16 %v191, %v190
    %v204 = vpack.c.b16 %v193, %v192
    %v205 = vpack.c.b16 %v195, %v194
    %v206 = vpack.c.b16 %v197, %v196
    %v207 = vpack.c.b16 %v199, %v198
    %216 = vmatprep.subr.bf16.mxu0 0
    %217 = vmatpush1.bf16.msra.mxu0 %v200
    %218 = vmatprep.subr.bf16.mxu0 0
    %219 = vmatpush1.bf16.msra.mxu0 %v201
    %220 = vmatprep.subr.bf16.mxu0 0
    %221 = vmatpush1.bf16.msra.mxu0 %v202
    %222 = vmatprep.subr.bf16.mxu0 0
    %223 = vmatpush1.bf16.msra.mxu0 %v203
    %224 = vmatprep.subr.bf16.mxu0 0
    %225 = vmatpush1.bf16.msra.mxu0 %v204
    %226 = vmatprep.subr.bf16.mxu0 0
    %227 = vmatpush1.bf16.msra.mxu0 %v205
    %228 = vmatprep.subr.bf16.mxu0 0
    %229 = vmatpush1.bf16.msra.mxu0 %v206
    %230 = vmatprep.subr.bf16.mxu0 0
    %231 = vmatpush1.bf16.msra.mxu0 %v207
    %232 = vmatprep.subr.bf16.mxu0 0
    %233 = vmatpush1.bf16.msra.mxu0 0
    %234 = vmatprep.subr.bf16.mxu0 0
    %235 = vmatpush1.bf16.msra.mxu0 0
    %236 = vmatprep.subr.bf16.mxu0 0
    %237 = vmatpush1.bf16.msra.mxu0 0
    %238 = vmatprep.subr.bf16.mxu0 0
    %239 = vmatpush1.bf16.msra.mxu0 0
    %240 = vmatprep.subr.bf16.mxu0 0
    %241 = vmatpush1.bf16.msra.mxu0 0
    %242 = vmatprep.subr.bf16.mxu0 0
    %243 = vmatpush1.bf16.msra.mxu0 0
    %244 = vmatprep.subr.bf16.mxu0 0
    %245 = vmatpush1.bf16.msra.mxu0 0
    %246 = vmatprep.subr.bf16.mxu0 0
    %247 = vmatpush1.bf16.msra.mxu0 0
    %248 = vmatprep.mubr.bf16.mxu0 0
    %249 = vmatmul.mubr.bf16.gmra.mrb[0].mxu0 %v148
    %v250 = vpop.f32.mrb[0].mxu0
    %v251 = vadd.f32 0.0, %v250
    %v252 = vpop.f32.mrb[0].mxu0
    %v253 = vpop.f32.mrb[0].mxu0
    %v254 = vadd.f32 0.0, %v253
    %v255 = vpop.f32.mrb[0].mxu0
    %256 = vmatprep.mubr.bf16.mxu0 0
    %257 = vmatmul.mubr.bf16.gmra.mrb[0].mxu0 %v149
    %v258 = vpop.f32.mrb[0].mxu0
    %v259 = vadd.f32 0.0, %v258
    %v260 = vpop.f32.mrb[0].mxu0
    %v261 = vpop.f32.mrb[0].mxu0
    %v262 = vadd.f32 0.0, %v261
    %v263 = vpop.f32.mrb[0].mxu0
    %264 = vmatprep.mubr.bf16.mxu0 0
    %265 = vmatmul.mubr.bf16.gmra.mrb[0].mxu0 %v150
    %v266 = vpop.f32.mrb[0].mxu0
    %v267 = vadd.f32 0.0, %v266
    %v268 = vpop.f32.mrb[0].mxu0
    %v269 = vpop.f32.mrb[0].mxu0
    %v270 = vadd.f32 0.0, %v269
    %v271 = vpop.f32.mrb[0].mxu0
    %272 = vmatprep.mubr.bf16.mxu0 0
    %273 = vmatmul.mubr.bf16.gmra.mrb[0].mxu0 %v151
    %v274 = vpop.f32.mrb[0].mxu0
    %v275 = vadd.f32 0.0, %v274
    %v276 = vpop.f32.mrb[0].mxu0
    %v277 = vpop.f32.mrb[0].mxu0
    %v278 = vadd.f32 0.0, %v277
    %v279 = vpop.f32.mrb[0].mxu0
    %280 = vdwg.mxu0
    %v281 = vld [vmem:[#allocation4 + $0x80] sm:$0xff]
    %v282 = vld [vmem:[#allocation4 + $0x88] sm:$0xff]
    %v283 = vld [vmem:[#allocation4 + $0x90] sm:$0xff]
    %v284 = vld [vmem:[#allocation4 + $0x98] sm:$0xff]
    %v285 = vld [vmem:[#allocation4 + $0xa0] sm:$0xff]
    %v286 = vld [vmem:[#allocation4 + $0xa8] sm:$0xff]
    %v287 = vld [vmem:[#allocation4 + $0xb0] sm:$0xff]
    %v288 = vld [vmem:[#allocation4 + $0xb8] sm:$0xff]
    %v289 = vpack.c.bf16 %v254, %v251
    %v290 = vpack.c.bf16 %v262, %v259
    %v291 = vpack.c.bf16 %v270, %v267
    %v292 = vpack.c.bf16 %v278, %v275
    %v293 = vld [vmem:[%s3] ss:$2 sm:$0x3]
    %v295 = vlaneseq
    %v296 = vshrl.u32 %v295, 7
    %v297 = vsub.s32 0, %v296
    %v298 = vrot.slane %v293, %v297
    %v299 = vlaneseq
    %v300 = vshrl.u32 %v299, 7
    %v301 = vsub.s32 1, %v300
    %v302 = vrot.slane %v293, %v301
    %v313 = vunpack.c.l.b16 %v281
    %v314 = vunpack.c.h.b16 %v281
    %v315 = vunpack.c.l.b16 %v282
    %v316 = vunpack.c.h.b16 %v282
    %v317 = vunpack.c.l.b16 %v283
    %v318 = vunpack.c.h.b16 %v283
    %v319 = vunpack.c.l.b16 %v284
    %v320 = vunpack.c.h.b16 %v284
    %v321 = vunpack.c.l.b16 %v285
    %v322 = vunpack.c.h.b16 %v285
    %v323 = vunpack.c.l.b16 %v286
    %v324 = vunpack.c.h.b16 %v286
    %v325 = vunpack.c.l.b16 %v287
    %v326 = vunpack.c.h.b16 %v287
    %v327 = vunpack.c.l.b16 %v288
    %v328 = vunpack.c.h.b16 %v288
    %v329 = vpack.c.b16 %v315, %v313
    %v330 = vpack.c.b16 %v316, %v314
    %v331 = vpack.c.b16 %v319, %v317
    %v332 = vpack.c.b16 %v320, %v318
    %v333 = vpack.c.b16 %v323, %v321
    %v334 = vpack.c.b16 %v324, %v322
    %v335 = vpack.c.b16 %v327, %v325
    %v336 = vpack.c.b16 %v328, %v326
    %vm345 = vcmask 523264
    %v347 = vsel %vm345, %v289, 0
    %v350 = vsel %vm345, %v290, 0
    %v353 = vsel %vm345, %v291, 0
    %v356 = vsel %vm345, %v292, 0
    %358 = vmatprep.subr.bf16.mxu0 %v330
    %359 = vmatpush1.bf16.msra.mxu0 %v329
    %360 = vmatprep.subr.bf16.mxu0 %v332
    %361 = vmatpush1.bf16.msra.mxu0 %v331
    %362 = vmatprep.subr.bf16.mxu0 %v334
    %363 = vmatpush1.bf16.msra.mxu0 %v333
    %364 = vmatprep.subr.bf16.mxu0 %v336
    %365 = vmatpush1.bf16.msra.mxu0 %v335
    %366 = vmatprep.subr.bf16.mxu0 0
    %367 = vmatpush1.bf16.msra.mxu0 0
    %368 = vmatprep.subr.bf16.mxu0 0
    %369 = vmatpush1.bf16.msra.mxu0 0
    %370 = vmatprep.subr.bf16.mxu0 0
    %371 = vmatpush1.bf16.msra.mxu0 0
    %372 = vmatprep.subr.bf16.mxu0 0
    %373 = vmatpush1.bf16.msra.mxu0 0
    %374 = vmatprep.subr.bf16.mxu0 0
    %375 = vmatpush1.bf16.msra.mxu0 0
    %376 = vmatprep.subr.bf16.mxu0 0
    %377 = vmatpush1.bf16.msra.mxu0 0
    %378 = vmatprep.subr.bf16.mxu0 0
    %379 = vmatpush1.bf16.msra.mxu0 0
    %380 = vmatprep.subr.bf16.mxu0 0
    %381 = vmatpush1.bf16.msra.mxu0 0
    %382 = vmatprep.subr.bf16.mxu0 0
    %383 = vmatpush1.bf16.msra.mxu0 0
    %384 = vmatprep.subr.bf16.mxu0 0
    %385 = vmatpush1.bf16.msra.mxu0 0
    %386 = vmatprep.subr.bf16.mxu0 0
    %387 = vmatpush1.bf16.msra.mxu0 0
    %388 = vmatprep.subr.bf16.mxu0 0
    %389 = vmatpush1.bf16.msra.mxu0 0
    %390 = vmatprep.mubr.bf16.mxu0 0
    %391 = vmatmul.mubr.bf16.gmra.mrb[0].mxu0 %v347
    %v392 = vpop.f32.mrb[0].mxu0
    %v393 = vadd.f32 %v298, %v392
    %v394 = vpop.f32.mrb[0].mxu0
    %v395 = vadd.f32 %v302, %v394
    %v396 = vpop.f32.mrb[0].mxu0
    %v397 = vadd.f32 %v298, %v396
    %v398 = vpop.f32.mrb[0].mxu0
    %v399 = vadd.f32 %v302, %v398
    %400 = vmatprep.mubr.bf16.mxu0 0
    %401 = vmatmul.mubr.bf16.gmra.mrb[0].mxu0 %v350
    %v402 = vpop.f32.mrb[0].mxu0
    %v403 = vadd.f32 %v298, %v402
    %v404 = vpop.f32.mrb[0].mxu0
    %v405 = vadd.f32 %v302, %v404
    %v406 = vpop.f32.mrb[0].mxu0
    %v407 = vadd.f32 %v298, %v406
    %v408 = vpop.f32.mrb[0].mxu0
    %v409 = vadd.f32 %v302, %v408
    %410 = vmatprep.mubr.bf16.mxu0 0
    %411 = vmatmul.mubr.bf16.gmra.mrb[0].mxu0 %v353
    %v412 = vpop.f32.mrb[0].mxu0
    %v413 = vadd.f32 %v298, %v412
    %v414 = vpop.f32.mrb[0].mxu0
    %v415 = vadd.f32 %v302, %v414
    %v416 = vpop.f32.mrb[0].mxu0
    %v417 = vadd.f32 %v298, %v416
    %v418 = vpop.f32.mrb[0].mxu0
    %v419 = vadd.f32 %v302, %v418
    %420 = vmatprep.mubr.bf16.mxu0 0
    %421 = vmatmul.mubr.bf16.gmra.mrb[0].mxu0 %v356
    %v422 = vpop.f32.mrb[0].mxu0
    %v423 = vadd.f32 %v298, %v422
    %v424 = vpop.f32.mrb[0].mxu0
    %v425 = vadd.f32 %v302, %v424
    %v426 = vpop.f32.mrb[0].mxu0
    %v427 = vadd.f32 %v298, %v426
    %v428 = vpop.f32.mrb[0].mxu0
    %v429 = vadd.f32 %v302, %v428
    %430 = vdwg.mxu0
    %431 = vst [vmem:[#allocation2] sm:$0xff] %v393
    %432 = vst [vmem:[#allocation2 + $0x8] sm:$0xff] %v395
    %433 = vst [vmem:[#allocation2 + $0x10] sm:$0xff] %v397
    %434 = vst [vmem:[#allocation2 + $0x18] sm:$0xff] %v399
    %435 = vst [vmem:[#allocation2 + $0x20] sm:$0xff] %v403
    %436 = vst [vmem:[#allocation2 + $0x28] sm:$0xff] %v405
    %437 = vst [vmem:[#allocation2 + $0x30] sm:$0xff] %v407
    %438 = vst [vmem:[#allocation2 + $0x38] sm:$0xff] %v409
    %439 = vst [vmem:[#allocation2 + $0x40] sm:$0xff] %v413
    %440 = vst [vmem:[#allocation2 + $0x48] sm:$0xff] %v415
    %441 = vst [vmem:[#allocation2 + $0x50] sm:$0xff] %v417
    %442 = vst [vmem:[#allocation2 + $0x58] sm:$0xff] %v419
    %443 = vst [vmem:[#allocation2 + $0x60] sm:$0xff] %v423
    %444 = vst [vmem:[#allocation2 + $0x68] sm:$0xff] %v425
    %445 = vst [vmem:[#allocation2 + $0x70] sm:$0xff] %v427
    %446 = vst [vmem:[#allocation2 + $0x78] sm:$0xff] %v429
    %v447 = vld [vmem:[#allocation4 + $0xc0] sm:$0xff]
    %v448 = vld [vmem:[#allocation4 + $0xc8] sm:$0xff]
    %v449 = vld [vmem:[#allocation4 + $0xd0] sm:$0xff]
    %v450 = vld [vmem:[#allocation4 + $0xd8] sm:$0xff]
    %v451 = vld [vmem:[#allocation4 + $0xe0] sm:$0xff]
    %v452 = vld [vmem:[#allocation4 + $0xe8] sm:$0xff]
    %v453 = vld [vmem:[#allocation4 + $0xf0] sm:$0xff]
    %v454 = vld [vmem:[#allocation4 + $0xf8] sm:$0xff]
    %v455 = vld [vmem:[%s1] sm:$0xff]
    %s456 = scalar_lea.vmem %s1, 8
    %v457 = vld [vmem:[%s456] sm:$0xff]
    %s458 = smul.u32 0, 2
    %s459 = smul.addr %s458, 8
    %s460 = scalar_lea.vmem [#allocation2], %s459
    %v461 = vld [vmem:[%s460] sm:$0xff]
    %v462 = vld [vmem:[%s460 + $0x8] sm:$0xff]
    %v463 = vpack.c.bf16 %v455, %v455
    %v472 = vunpack.c.l.b16 %v447
    %v473 = vunpack.c.h.b16 %v447
    %v474 = vunpack.c.l.b16 %v448
    %v475 = vunpack.c.h.b16 %v448
    %v476 = vunpack.c.l.b16 %v449
    %v477 = vunpack.c.h.b16 %v449
    %v478 = vunpack.c.l.b16 %v450
    %v479 = vunpack.c.h.b16 %v450
    %v480 = vunpack.c.l.b16 %v451
    %v481 = vunpack.c.h.b16 %v451
    %v482 = vunpack.c.l.b16 %v452
    %v483 = vunpack.c.h.b16 %v452
    %v484 = vunpack.c.l.b16 %v453
    %v485 = vunpack.c.h.b16 %v453
    %v486 = vunpack.c.l.b16 %v454
    %v487 = vunpack.c.h.b16 %v454
    %v488 = vpack.c.b16 %v474, %v472
    %v489 = vpack.c.b16 %v475, %v473
    %v490 = vpack.c.b16 %v478, %v476
    %v491 = vpack.c.b16 %v479, %v477
    %v492 = vpack.c.b16 %v482, %v480
    %v493 = vpack.c.b16 %v483, %v481
    %v494 = vpack.c.b16 %v486, %v484
    %v495 = vpack.c.b16 %v487, %v485
    %v505 = vsel %vm345, %v463, 0
    %507 = vmatprep.subr.bf16.mxu0 %v489
    %508 = vmatpush1.bf16.msra.mxu0 %v488
    %509 = vmatprep.subr.bf16.mxu0 %v491
    %510 = vmatpush1.bf16.msra.mxu0 %v490
    %511 = vmatprep.subr.bf16.mxu0 %v493
    %512 = vmatpush1.bf16.msra.mxu0 %v492
    %513 = vmatprep.subr.bf16.mxu0 %v495
    %514 = vmatpush1.bf16.msra.mxu0 %v494
    %515 = vmatprep.subr.bf16.mxu0 0
    %516 = vmatpush1.bf16.msra.mxu0 0
    %517 = vmatprep.subr.bf16.mxu0 0
    %518 = vmatpush1.bf16.msra.mxu0 0
    %519 = vmatprep.subr.bf16.mxu0 0
    %520 = vmatpush1.bf16.msra.mxu0 0
    %521 = vmatprep.subr.bf16.mxu0 0
    %522 = vmatpush1.bf16.msra.mxu0 0
    %523 = vmatprep.subr.bf16.mxu0 0
    %524 = vmatpush1.bf16.msra.mxu0 0
    %525 = vmatprep.subr.bf16.mxu0 0
    %526 = vmatpush1.bf16.msra.mxu0 0
    %527 = vmatprep.subr.bf16.mxu0 0
    %528 = vmatpush1.bf16.msra.mxu0 0
    %529 = vmatprep.subr.bf16.mxu0 0
    %530 = vmatpush1.bf16.msra.mxu0 0
    %531 = vmatprep.subr.bf16.mxu0 0
    %532 = vmatpush1.bf16.msra.mxu0 0
    %533 = vmatprep.subr.bf16.mxu0 0
    %534 = vmatpush1.bf16.msra.mxu0 0
    %535 = vmatprep.subr.bf16.mxu0 0
    %536 = vmatpush1.bf16.msra.mxu0 0
    %537 = vmatprep.subr.bf16.mxu0 0
    %538 = vmatpush1.bf16.msra.mxu0 0
    %539 = vmatprep.mubr.bf16.mxu0 0
    %540 = vmatmul.mubr.bf16.gmra.mrb[0].mxu0 %v505
    %v541 = vpop.f32.mrb[0].mxu0
    %v542 = vadd.f32 0.0, %v541
    %v543 = vpop.f32.mrb[0].mxu0
    %v544 = vadd.f32 0.0, %v543
    %v545 = vpop.f32.mrb[0].mxu0
    %v546 = vpop.f32.mrb[0].mxu0
    %547 = vdwg.mxu0
    %v548 = vadd.f32 %v461, %v542
    %v549 = vadd.f32 %v462, %v544
    %v550 = vxor.u32 %v548, 2147483648
    %v551 = vxor.u32 %v549, 2147483648
    %v552 = vmul.f32 %v550, 1.442695
    %v553 = vpow.pop %v552
    %v554 = vmul.f32 %v551, 1.442695
    %v555 = vpow.pop %v554
    %v556 = vadd.f32 %v553, 1.0
    %v557 = vadd.f32 %v555, 1.0
    %v558 = vrcp.pop %v556
    %v559 = vmul.f32 1.0, %v558
    %v560 = vrcp.pop %v557
    %v561 = vmul.f32 1.0, %v560
    %v562 = vtanh.pop %v549
    %564 = vrot.lane.b32.xlu0 %v457, 64
    %v565 = vpop.permute.xlu0 %564
    %v567 = vmul.f32 %v559, %v565
    %569 = vrot.lane.b32.xlu0 %v562, 64
    %v570 = vpop.permute.xlu0 %569
    %v572 = vmul.f32 %v559, %v570
    %574 = vrot.lane.b32.xlu0 %v572, 64
    %v575 = vpop.permute.xlu0 %574
    %v577 = vadd.f32 %v567, %v575
    %v578 = vtanh.pop %v577
    %580 = vrot.lane.b32.xlu0 %v578, 64
    %v581 = vpop.permute.xlu0 %580
    %v583 = vmul.f32 %v561, %v581
    %vm584 = vcmask 261120
    %585 = vst.msk [vmem:[#allocation3] sm:$0xff] %vm584, %v583
    %s586 = scalar_lea.vmem [#allocation3], 56
    %vm587 = vcmask 523520
    %588 = vst.msk [vmem:[%s586] sm:$0xff] %vm587, %v583
    %s589 = smul.u32 1, 2
    %s590 = smul.addr %s589, 8
    %s591 = scalar_lea.vmem [#allocation2], %s590
    %v592 = vld [vmem:[%s591] sm:$0xff]
    %v593 = vld [vmem:[%s591 + $0x8] sm:$0xff]
    %v594 = vpack.c.bf16 %v583, %v583
    %v596 = vsel %vm345, %v594, 0
    %598 = vmatprep.subr.bf16.mxu0 %v489
    %599 = vmatpush1.bf16.msra.mxu0 %v488
    %600 = vmatprep.subr.bf16.mxu0 %v491
    %601 = vmatpush1.bf16.msra.mxu0 %v490
    %602 = vmatprep.subr.bf16.mxu0 %v493
    %603 = vmatpush1.bf16.msra.mxu0 %v492
    %604 = vmatprep.subr.bf16.mxu0 %v495
    %605 = vmatpush1.bf16.msra.mxu0 %v494
    %606 = vmatprep.subr.bf16.mxu0 0
    %607 = vmatpush1.bf16.msra.mxu0 0
    %608 = vmatprep.subr.bf16.mxu0 0
    %609 = vmatpush1.bf16.msra.mxu0 0
    %610 = vmatprep.subr.bf16.mxu0 0
    %611 = vmatpush1.bf16.msra.mxu0 0
    %612 = vmatprep.subr.bf16.mxu0 0
    %613 = vmatpush1.bf16.msra.mxu0 0
    %614 = vmatprep.subr.bf16.mxu0 0
    %615 = vmatpush1.bf16.msra.mxu0 0
    %616 = vmatprep.subr.bf16.mxu0 0
    %617 = vmatpush1.bf16.msra.mxu0 0
    %618 = vmatprep.subr.bf16.mxu0 0
    %619 = vmatpush1.bf16.msra.mxu0 0
    %620 = vmatprep.subr.bf16.mxu0 0
    %621 = vmatpush1.bf16.msra.mxu0 0
    %622 = vmatprep.subr.bf16.mxu0 0
    %623 = vmatpush1.bf16.msra.mxu0 0
    %624 = vmatprep.subr.bf16.mxu0 0
    %625 = vmatpush1.bf16.msra.mxu0 0
    %626 = vmatprep.subr.bf16.mxu0 0
    %627 = vmatpush1.bf16.msra.mxu0 0
    %628 = vmatprep.subr.bf16.mxu0 0
    %629 = vmatpush1.bf16.msra.mxu0 0
    %630 = vmatprep.mubr.bf16.mxu0 0
    %631 = vmatmul.mubr.bf16.gmra.mrb[0].mxu0 %v596
    %v632 = vpop.f32.mrb[0].mxu0
    %v633 = vadd.f32 0.0, %v632
    %v634 = vpop.f32.mrb[0].mxu0
    %v635 = vadd.f32 0.0, %v634
    %v636 = vpop.f32.mrb[0].mxu0
    %v637 = vpop.f32.mrb[0].mxu0
    %638 = vdwg.mxu0
    %v639 = vadd.f32 %v592, %v633
    %v640 = vadd.f32 %v593, %v635
    %v641 = vxor.u32 %v639, 2147483648
    %v642 = vxor.u32 %v640, 2147483648
    %v643 = vmul.f32 %v641, 1.442695
    %v644 = vpow.pop %v643
    %v645 = vmul.f32 %v642, 1.442695
    %v646 = vpow.pop %v645
    %v647 = vadd.f32 %v644, 1.0
    %v648 = vadd.f32 %v646, 1.0
    %v649 = vrcp.pop %v647
    %v650 = vmul.f32 1.0, %v649
    %v651 = vrcp.pop %v648
    %v652 = vmul.f32 1.0, %v651
    %v653 = vtanh.pop %v640
    %v654 = vmul.f32 %v650, %v577
    %656 = vrot.lane.b32.xlu0 %v653, 64
    %v657 = vpop.permute.xlu0 %656
    %v659 = vmul.f32 %v650, %v657
    %661 = vrot.lane.b32.xlu0 %v659, 64
    %v662 = vpop.permute.xlu0 %661
    %v664 = vadd.f32 %v654, %v662
    %v665 = vtanh.pop %v664
    %667 = vrot.lane.b32.xlu0 %v665, 64
    %v668 = vpop.permute.xlu0 %667
    %v670 = vmul.f32 %v652, %v668
    %s671 = scalar_lea.vmem [#allocation3], 8
    %672 = vst.msk [vmem:[%s671] sm:$0xff] %vm584, %v670
    %s673 = scalar_lea.vmem [#allocation3], 48
    %674 = vst.msk [vmem:[%s673] sm:$0xff] %vm587, %v670
    %s675 = smul.u32 2, 2
    %s676 = smul.addr %s675, 8
    %s677 = scalar_lea.vmem [#allocation2], %s676
    %v678 = vld [vmem:[%s677] sm:$0xff]
    %v679 = vld [vmem:[%s677 + $0x8] sm:$0xff]
    %v680 = vpack.c.bf16 %v670, %v670
    %v682 = vsel %vm345, %v680, 0
    %684 = vmatprep.subr.bf16.mxu0 %v489
    %685 = vmatpush1.bf16.msra.mxu0 %v488
    %686 = vmatprep.subr.bf16.mxu0 %v491
    %687 = vmatpush1.bf16.msra.mxu0 %v490
    %688 = vmatprep.subr.bf16.mxu0 %v493
    %689 = vmatpush1.bf16.msra.mxu0 %v492
    %690 = vmatprep.subr.bf16.mxu0 %v495
    %691 = vmatpush1.bf16.msra.mxu0 %v494
    %692 = vmatprep.subr.bf16.mxu0 0
    %693 = vmatpush1.bf16.msra.mxu0 0
    %694 = vmatprep.subr.bf16.mxu0 0
    %695 = vmatpush1.bf16.msra.mxu0 0
    %696 = vmatprep.subr.bf16.mxu0 0
    %697 = vmatpush1.bf16.msra.mxu0 0
    %698 = vmatprep.subr.bf16.mxu0 0
    %699 = vmatpush1.bf16.msra.mxu0 0
    %700 = vmatprep.subr.bf16.mxu0 0
    %701 = vmatpush1.bf16.msra.mxu0 0
    %702 = vmatprep.subr.bf16.mxu0 0
    %703 = vmatpush1.bf16.msra.mxu0 0
    %704 = vmatprep.subr.bf16.mxu0 0
    %705 = vmatpush1.bf16.msra.mxu0 0
    %706 = vmatprep.subr.bf16.mxu0 0
    %707 = vmatpush1.bf16.msra.mxu0 0
    %708 = vmatprep.subr.bf16.mxu0 0
    %709 = vmatpush1.bf16.msra.mxu0 0
    %710 = vmatprep.subr.bf16.mxu0 0
    %711 = vmatpush1.bf16.msra.mxu0 0
    %712 = vmatprep.subr.bf16.mxu0 0
    %713 = vmatpush1.bf16.msra.mxu0 0
    %714 = vmatprep.subr.bf16.mxu0 0
    %715 = vmatpush1.bf16.msra.mxu0 0
    %716 = vmatprep.mubr.bf16.mxu0 0
    %717 = vmatmul.mubr.bf16.gmra.mrb[0].mxu0 %v682
    %v718 = vpop.f32.mrb[0].mxu0
    %v719 = vadd.f32 0.0, %v718
    %v720 = vpop.f32.mrb[0].mxu0
    %v721 = vadd.f32 0.0, %v720
    %v722 = vpop.f32.mrb[0].mxu0
    %v723 = vpop.f32.mrb[0].mxu0
    %724 = vdwg.mxu0
    %v725 = vadd.f32 %v678, %v719
    %v726 = vadd.f32 %v679, %v721
    %v727 = vxor.u32 %v725, 2147483648
    %v728 = vxor.u32 %v726, 2147483648
    %v729 = vmul.f32 %v727, 1.442695
    %v730 = vpow.pop %v729
    %v731 = vmul.f32 %v728, 1.442695
    %v732 = vpow.pop %v731
    %v733 = vadd.f32 %v730, 1.0
    %v734 = vadd.f32 %v732, 1.0
    %v735 = vrcp.pop %v733
    %v736 = vmul.f32 1.0, %v735
    %v737 = vrcp.pop %v734
    %v738 = vmul.f32 1.0, %v737
    %v739 = vtanh.pop %v726
    %v740 = vmul.f32 %v736, %v664
    %742 = vrot.lane.b32.xlu0 %v739, 64
    %v743 = vpop.permute.xlu0 %742
    %v745 = vmul.f32 %v736, %v743
    %747 = vrot.lane.b32.xlu0 %v745, 64
    %v748 = vpop.permute.xlu0 %747
    %v750 = vadd.f32 %v740, %v748
    %v751 = vtanh.pop %v750
    %753 = vrot.lane.b32.xlu0 %v751, 64
    %v754 = vpop.permute.xlu0 %753
    %v756 = vmul.f32 %v738, %v754
    %s757 = scalar_lea.vmem [#allocation3], 16
    %758 = vst.msk [vmem:[%s757] sm:$0xff] %vm584, %v756
    %s759 = scalar_lea.vmem [#allocation3], 40
    %760 = vst.msk [vmem:[%s759] sm:$0xff] %vm587, %v756
    %s761 = smul.u32 3, 2
    %s762 = smul.addr %s761, 8
    %s763 = scalar_lea.vmem [#allocation2], %s762
    %v764 = vld [vmem:[%s763] sm:$0xff]
    %v765 = vld [vmem:[%s763 + $0x8] sm:$0xff]
    %v766 = vpack.c.bf16 %v756, %v756
    %v768 = vsel %vm345, %v766, 0
    %770 = vmatprep.subr.bf16.mxu0 %v489
    %771 = vmatpush1.bf16.msra.mxu0 %v488
    %772 = vmatprep.subr.bf16.mxu0 %v491
    %773 = vmatpush1.bf16.msra.mxu0 %v490
    %774 = vmatprep.subr.bf16.mxu0 %v493
    %775 = vmatpush1.bf16.msra.mxu0 %v492
    %776 = vmatprep.subr.bf16.mxu0 %v495
    %777 = vmatpush1.bf16.msra.mxu0 %v494
    %778 = vmatprep.subr.bf16.mxu0 0
    %779 = vmatpush1.bf16.msra.mxu0 0
    %780 = vmatprep.subr.bf16.mxu0 0
    %781 = vmatpush1.bf16.msra.mxu0 0
    %782 = vmatprep.subr.bf16.mxu0 0
    %783 = vmatpush1.bf16.msra.mxu0 0
    %784 = vmatprep.subr.bf16.mxu0 0
    %785 = vmatpush1.bf16.msra.mxu0 0
    %786 = vmatprep.subr.bf16.mxu0 0
    %787 = vmatpush1.bf16.msra.mxu0 0
    %788 = vmatprep.subr.bf16.mxu0 0
    %789 = vmatpush1.bf16.msra.mxu0 0
    %790 = vmatprep.subr.bf16.mxu0 0
    %791 = vmatpush1.bf16.msra.mxu0 0
    %792 = vmatprep.subr.bf16.mxu0 0
    %793 = vmatpush1.bf16.msra.mxu0 0
    %794 = vmatprep.subr.bf16.mxu0 0
    %795 = vmatpush1.bf16.msra.mxu0 0
    %796 = vmatprep.subr.bf16.mxu0 0
    %797 = vmatpush1.bf16.msra.mxu0 0
    %798 = vmatprep.subr.bf16.mxu0 0
    %799 = vmatpush1.bf16.msra.mxu0 0
    %800 = vmatprep.subr.bf16.mxu0 0
    %801 = vmatpush1.bf16.msra.mxu0 0
    %802 = vmatprep.mubr.bf16.mxu0 0
    %803 = vmatmul.mubr.bf16.gmra.mrb[0].mxu0 %v768
    %v804 = vpop.f32.mrb[0].mxu0
    %v805 = vadd.f32 0.0, %v804
    %v806 = vpop.f32.mrb[0].mxu0
    %v807 = vadd.f32 0.0, %v806
    %v808 = vpop.f32.mrb[0].mxu0
    %v809 = vpop.f32.mrb[0].mxu0
    %810 = vdwg.mxu0
    %v811 = vadd.f32 %v764, %v805
    %v812 = vadd.f32 %v765, %v807
    %v813 = vxor.u32 %v811, 2147483648
    %v814 = vxor.u32 %v812, 2147483648
    %v815 = vmul.f32 %v813, 1.442695
    %v816 = vpow.pop %v815
    %v817 = vmul.f32 %v814, 1.442695
    %v818 = vpow.pop %v817
    %v819 = vadd.f32 %v816, 1.0
    %v820 = vadd.f32 %v818, 1.0
    %v821 = vrcp.pop %v819
    %v822 = vmul.f32 1.0, %v821
    %v823 = vrcp.pop %v820
    %v824 = vmul.f32 1.0, %v823
    %v825 = vtanh.pop %v812
    %v826 = vmul.f32 %v822, %v750
    %828 = vrot.lane.b32.xlu0 %v825, 64
    %v829 = vpop.permute.xlu0 %828
    %v831 = vmul.f32 %v822, %v829
    %833 = vrot.lane.b32.xlu0 %v831, 64
    %v834 = vpop.permute.xlu0 %833
    %v836 = vadd.f32 %v826, %v834
    %v837 = vtanh.pop %v836
    %839 = vrot.lane.b32.xlu0 %v837, 64
    %v840 = vpop.permute.xlu0 %839
    %v842 = vmul.f32 %v824, %v840
    %s843 = scalar_lea.vmem [#allocation3], 24
    %844 = vst.msk [vmem:[%s843] sm:$0xff] %vm584, %v842
    %s845 = scalar_lea.vmem [#allocation3], 32
    %846 = vst.msk [vmem:[%s845] sm:$0xff] %vm587, %v842
    %s847 = smul.u32 4, 2
    %s848 = smul.addr %s847, 8
    %s849 = scalar_lea.vmem [#allocation2], %s848
    %v850 = vld [vmem:[%s849] sm:$0xff]
    %v851 = vld [vmem:[%s849 + $0x8] sm:$0xff]
    %v852 = vpack.c.bf16 %v842, %v842
    %v854 = vsel %vm345, %v852, 0
    %856 = vmatprep.subr.bf16.mxu0 %v489
    %857 = vmatpush1.bf16.msra.mxu0 %v488
    %858 = vmatprep.subr.bf16.mxu0 %v491
    %859 = vmatpush1.bf16.msra.mxu0 %v490
    %860 = vmatprep.subr.bf16.mxu0 %v493
    %861 = vmatpush1.bf16.msra.mxu0 %v492
    %862 = vmatprep.subr.bf16.mxu0 %v495
    %863 = vmatpush1.bf16.msra.mxu0 %v494
    %864 = vmatprep.subr.bf16.mxu0 0
    %865 = vmatpush1.bf16.msra.mxu0 0
    %866 = vmatprep.subr.bf16.mxu0 0
    %867 = vmatpush1.bf16.msra.mxu0 0
    %868 = vmatprep.subr.bf16.mxu0 0
    %869 = vmatpush1.bf16.msra.mxu0 0
    %870 = vmatprep.subr.bf16.mxu0 0
    %871 = vmatpush1.bf16.msra.mxu0 0
    %872 = vmatprep.subr.bf16.mxu0 0
    %873 = vmatpush1.bf16.msra.mxu0 0
    %874 = vmatprep.subr.bf16.mxu0 0
    %875 = vmatpush1.bf16.msra.mxu0 0
    %876 = vmatprep.subr.bf16.mxu0 0
    %877 = vmatpush1.bf16.msra.mxu0 0
    %878 = vmatprep.subr.bf16.mxu0 0
    %879 = vmatpush1.bf16.msra.mxu0 0
    %880 = vmatprep.subr.bf16.mxu0 0
    %881 = vmatpush1.bf16.msra.mxu0 0
    %882 = vmatprep.subr.bf16.mxu0 0
    %883 = vmatpush1.bf16.msra.mxu0 0
    %884 = vmatprep.subr.bf16.mxu0 0
    %885 = vmatpush1.bf16.msra.mxu0 0
    %886 = vmatprep.subr.bf16.mxu0 0
    %887 = vmatpush1.bf16.msra.mxu0 0
    %888 = vmatprep.mubr.bf16.mxu0 0
    %889 = vmatmul.mubr.bf16.gmra.mrb[0].mxu0 %v854
    %v890 = vpop.f32.mrb[0].mxu0
    %v891 = vadd.f32 0.0, %v890
    %v892 = vpop.f32.mrb[0].mxu0
    %v893 = vadd.f32 0.0, %v892
    %v894 = vpop.f32.mrb[0].mxu0
    %v895 = vpop.f32.mrb[0].mxu0
    %896 = vdwg.mxu0
    %v897 = vadd.f32 %v850, %v891
    %v898 = vadd.f32 %v851, %v893
    %v899 = vxor.u32 %v897, 2147483648
    %v900 = vxor.u32 %v898, 2147483648
    %v901 = vmul.f32 %v899, 1.442695
    %v902 = vpow.pop %v901
    %v903 = vmul.f32 %v900, 1.442695
    %v904 = vpow.pop %v903
    %v905 = vadd.f32 %v902, 1.0
    %v906 = vadd.f32 %v904, 1.0
    %v907 = vrcp.pop %v905
    %v908 = vmul.f32 1.0, %v907
    %v909 = vrcp.pop %v906
    %v910 = vmul.f32 1.0, %v909
    %v911 = vtanh.pop %v898
    %v912 = vmul.f32 %v908, %v836
    %914 = vrot.lane.b32.xlu0 %v911, 64
    %v915 = vpop.permute.xlu0 %914
    %v917 = vmul.f32 %v908, %v915
    %919 = vrot.lane.b32.xlu0 %v917, 64
    %v920 = vpop.permute.xlu0 %919
    %v922 = vadd.f32 %v912, %v920
    %v923 = vtanh.pop %v922
    %925 = vrot.lane.b32.xlu0 %v923, 64
    %v926 = vpop.permute.xlu0 %925
    %v928 = vmul.f32 %v910, %v926
    %929 = vst.msk [vmem:[%s845] sm:$0xff] %vm584, %v928
    %930 = vst.msk [vmem:[%s843] sm:$0xff] %vm587, %v928
    %s931 = smul.u32 5, 2
    %s932 = smul.addr %s931, 8
    %s933 = scalar_lea.vmem [#allocation2], %s932
    %v934 = vld [vmem:[%s933] sm:$0xff]
    %v935 = vld [vmem:[%s933 + $0x8] sm:$0xff]
    %v936 = vpack.c.bf16 %v928, %v928
    %v938 = vsel %vm345, %v936, 0
    %940 = vmatprep.subr.bf16.mxu0 %v489
    %941 = vmatpush1.bf16.msra.mxu0 %v488
    %942 = vmatprep.subr.bf16.mxu0 %v491
    %943 = vmatpush1.bf16.msra.mxu0 %v490
    %944 = vmatprep.subr.bf16.mxu0 %v493
    %945 = vmatpush1.bf16.msra.mxu0 %v492
    %946 = vmatprep.subr.bf16.mxu0 %v495
    %947 = vmatpush1.bf16.msra.mxu0 %v494
    %948 = vmatprep.subr.bf16.mxu0 0
    %949 = vmatpush1.bf16.msra.mxu0 0
    %950 = vmatprep.subr.bf16.mxu0 0
    %951 = vmatpush1.bf16.msra.mxu0 0
    %952 = vmatprep.subr.bf16.mxu0 0
    %953 = vmatpush1.bf16.msra.mxu0 0
    %954 = vmatprep.subr.bf16.mxu0 0
    %955 = vmatpush1.bf16.msra.mxu0 0
    %956 = vmatprep.subr.bf16.mxu0 0
    %957 = vmatpush1.bf16.msra.mxu0 0
    %958 = vmatprep.subr.bf16.mxu0 0
    %959 = vmatpush1.bf16.msra.mxu0 0
    %960 = vmatprep.subr.bf16.mxu0 0
    %961 = vmatpush1.bf16.msra.mxu0 0
    %962 = vmatprep.subr.bf16.mxu0 0
    %963 = vmatpush1.bf16.msra.mxu0 0
    %964 = vmatprep.subr.bf16.mxu0 0
    %965 = vmatpush1.bf16.msra.mxu0 0
    %966 = vmatprep.subr.bf16.mxu0 0
    %967 = vmatpush1.bf16.msra.mxu0 0
    %968 = vmatprep.subr.bf16.mxu0 0
    %969 = vmatpush1.bf16.msra.mxu0 0
    %970 = vmatprep.subr.bf16.mxu0 0
    %971 = vmatpush1.bf16.msra.mxu0 0
    %972 = vmatprep.mubr.bf16.mxu0 0
    %973 = vmatmul.mubr.bf16.gmra.mrb[0].mxu0 %v938
    %v974 = vpop.f32.mrb[0].mxu0
    %v975 = vadd.f32 0.0, %v974
    %v976 = vpop.f32.mrb[0].mxu0
    %v977 = vadd.f32 0.0, %v976
    %v978 = vpop.f32.mrb[0].mxu0
    %v979 = vpop.f32.mrb[0].mxu0
    %980 = vdwg.mxu0
    %v981 = vadd.f32 %v934, %v975
    %v982 = vadd.f32 %v935, %v977
    %v983 = vxor.u32 %v981, 2147483648
    %v984 = vxor.u32 %v982, 2147483648
    %v985 = vmul.f32 %v983, 1.442695
    %v986 = vpow.pop %v985
    %v987 = vmul.f32 %v984, 1.442695
    %v988 = vpow.pop %v987
    %v989 = vadd.f32 %v986, 1.0
    %v990 = vadd.f32 %v988, 1.0
    %v991 = vrcp.pop %v989
    %v992 = vmul.f32 1.0, %v991
    %v993 = vrcp.pop %v990
    %v994 = vmul.f32 1.0, %v993
    %v995 = vtanh.pop %v982
    %v996 = vmul.f32 %v992, %v922
    %998 = vrot.lane.b32.xlu0 %v995, 64
    %v999 = vpop.permute.xlu0 %998
    %v1001 = vmul.f32 %v992, %v999
    %1003 = vrot.lane.b32.xlu0 %v1001, 64
    %v1004 = vpop.permute.xlu0 %1003
    %v1006 = vadd.f32 %v996, %v1004
    %v1007 = vtanh.pop %v1006
    %1009 = vrot.lane.b32.xlu0 %v1007, 64
    %v1010 = vpop.permute.xlu0 %1009
    %v1012 = vmul.f32 %v994, %v1010
    %1013 = vst.msk [vmem:[%s759] sm:$0xff] %vm584, %v1012
    %1014 = vst.msk [vmem:[%s757] sm:$0xff] %vm587, %v1012
    %s1015 = smul.u32 6, 2
    %s1016 = smul.addr %s1015, 8
    %s1017 = scalar_lea.vmem [#allocation2], %s1016
    %v1018 = vld [vmem:[%s1017] sm:$0xff]
    %v1019 = vld [vmem:[%s1017 + $0x8] sm:$0xff]
    %v1020 = vpack.c.bf16 %v1012, %v1012
    %v1022 = vsel %vm345, %v1020, 0
    %1024 = vmatprep.subr.bf16.mxu0 %v489
    %1025 = vmatpush1.bf16.msra.mxu0 %v488
    %1026 = vmatprep.subr.bf16.mxu0 %v491
    %1027 = vmatpush1.bf16.msra.mxu0 %v490
    %1028 = vmatprep.subr.bf16.mxu0 %v493
    %1029 = vmatpush1.bf16.msra.mxu0 %v492
    %1030 = vmatprep.subr.bf16.mxu0 %v495
    %1031 = vmatpush1.bf16.msra.mxu0 %v494
    %1032 = vmatprep.subr.bf16.mxu0 0
    %1033 = vmatpush1.bf16.msra.mxu0 0
    %1034 = vmatprep.subr.bf16.mxu0 0
    %1035 = vmatpush1.bf16.msra.mxu0 0
    %1036 = vmatprep.subr.bf16.mxu0 0
    %1037 = vmatpush1.bf16.msra.mxu0 0
    %1038 = vmatprep.subr.bf16.mxu0 0
    %1039 = vmatpush1.bf16.msra.mxu0 0
    %1040 = vmatprep.subr.bf16.mxu0 0
    %1041 = vmatpush1.bf16.msra.mxu0 0
    %1042 = vmatprep.subr.bf16.mxu0 0
    %1043 = vmatpush1.bf16.msra.mxu0 0
    %1044 = vmatprep.subr.bf16.mxu0 0
    %1045 = vmatpush1.bf16.msra.mxu0 0
    %1046 = vmatprep.subr.bf16.mxu0 0
    %1047 = vmatpush1.bf16.msra.mxu0 0
    %1048 = vmatprep.subr.bf16.mxu0 0
    %1049 = vmatpush1.bf16.msra.mxu0 0
    %1050 = vmatprep.subr.bf16.mxu0 0
    %1051 = vmatpush1.bf16.msra.mxu0 0
    %1052 = vmatprep.subr.bf16.mxu0 0
    %1053 = vmatpush1.bf16.msra.mxu0 0
    %1054 = vmatprep.subr.bf16.mxu0 0
    %1055 = vmatpush1.bf16.msra.mxu0 0
    %1056 = vmatprep.mubr.bf16.mxu0 0
    %1057 = vmatmul.mubr.bf16.gmra.mrb[0].mxu0 %v1022
    %v1058 = vpop.f32.mrb[0].mxu0
    %v1059 = vadd.f32 0.0, %v1058
    %v1060 = vpop.f32.mrb[0].mxu0
    %v1061 = vadd.f32 0.0, %v1060
    %v1062 = vpop.f32.mrb[0].mxu0
    %v1063 = vpop.f32.mrb[0].mxu0
    %1064 = vdwg.mxu0
    %v1065 = vadd.f32 %v1018, %v1059
    %v1066 = vadd.f32 %v1019, %v1061
    %v1067 = vxor.u32 %v1065, 2147483648
    %v1068 = vxor.u32 %v1066, 2147483648
    %v1069 = vmul.f32 %v1067, 1.442695
    %v1070 = vpow.pop %v1069
    %v1071 = vmul.f32 %v1068, 1.442695
    %v1072 = vpow.pop %v1071
    %v1073 = vadd.f32 %v1070, 1.0
    %v1074 = vadd.f32 %v1072, 1.0
    %v1075 = vrcp.pop %v1073
    %v1076 = vmul.f32 1.0, %v1075
    %v1077 = vrcp.pop %v1074
    %v1078 = vmul.f32 1.0, %v1077
    %v1079 = vtanh.pop %v1066
    %v1080 = vmul.f32 %v1076, %v1006
    %1082 = vrot.lane.b32.xlu0 %v1079, 64
    %v1083 = vpop.permute.xlu0 %1082
    %v1085 = vmul.f32 %v1076, %v1083
    %1087 = vrot.lane.b32.xlu0 %v1085, 64
    %v1088 = vpop.permute.xlu0 %1087
    %v1090 = vadd.f32 %v1080, %v1088
    %v1091 = vtanh.pop %v1090
    %1093 = vrot.lane.b32.xlu0 %v1091, 64
    %v1094 = vpop.permute.xlu0 %1093
    %v1096 = vmul.f32 %v1078, %v1094
    %1097 = vst.msk [vmem:[%s673] sm:$0xff] %vm584, %v1096
    %1098 = vst.msk [vmem:[%s671] sm:$0xff] %vm587, %v1096
    %s1099 = smul.u32 7, 2
    %s1100 = smul.addr %s1099, 8
    %s1101 = scalar_lea.vmem [#allocation2], %s1100
    %v1102 = vld [vmem:[%s1101] sm:$0xff]
    %v1103 = vld [vmem:[%s1101 + $0x8] sm:$0xff]
    %v1104 = vpack.c.bf16 %v1096, %v1096
    %v1106 = vsel %vm345, %v1104, 0
    %1108 = vmatprep.subr.bf16.mxu0 %v489
    %1109 = vmatpush1.bf16.msra.mxu0 %v488
    %1110 = vmatprep.subr.bf16.mxu0 %v491
    %1111 = vmatpush1.bf16.msra.mxu0 %v490
    %1112 = vmatprep.subr.bf16.mxu0 %v493
    %1113 = vmatpush1.bf16.msra.mxu0 %v492
    %1114 = vmatprep.subr.bf16.mxu0 %v495
    %1115 = vmatpush1.bf16.msra.mxu0 %v494
    %1116 = vmatprep.subr.bf16.mxu0 0
    %1117 = vmatpush1.bf16.msra.mxu0 0
    %1118 = vmatprep.subr.bf16.mxu0 0
    %1119 = vmatpush1.bf16.msra.mxu0 0
    %1120 = vmatprep.subr.bf16.mxu0 0
    %1121 = vmatpush1.bf16.msra.mxu0 0
    %1122 = vmatprep.subr.bf16.mxu0 0
    %1123 = vmatpush1.bf16.msra.mxu0 0
    %1124 = vmatprep.subr.bf16.mxu0 0
    %1125 = vmatpush1.bf16.msra.mxu0 0
    %1126 = vmatprep.subr.bf16.mxu0 0
    %1127 = vmatpush1.bf16.msra.mxu0 0
    %1128 = vmatprep.subr.bf16.mxu0 0
    %1129 = vmatpush1.bf16.msra.mxu0 0
    %1130 = vmatprep.subr.bf16.mxu0 0
    %1131 = vmatpush1.bf16.msra.mxu0 0
    %1132 = vmatprep.subr.bf16.mxu0 0
    %1133 = vmatpush1.bf16.msra.mxu0 0
    %1134 = vmatprep.subr.bf16.mxu0 0
    %1135 = vmatpush1.bf16.msra.mxu0 0
    %1136 = vmatprep.subr.bf16.mxu0 0
    %1137 = vmatpush1.bf16.msra.mxu0 0
    %1138 = vmatprep.subr.bf16.mxu0 0
    %1139 = vmatpush1.bf16.msra.mxu0 0
    %1140 = vmatprep.mubr.bf16.mxu0 0
    %1141 = vmatmul.mubr.bf16.gmra.mrb[0].mxu0 %v1106
    %v1142 = vpop.f32.mrb[0].mxu0
    %v1143 = vadd.f32 0.0, %v1142
    %v1144 = vpop.f32.mrb[0].mxu0
    %v1145 = vadd.f32 0.0, %v1144
    %v1146 = vpop.f32.mrb[0].mxu0
    %v1147 = vpop.f32.mrb[0].mxu0
    %1148 = vdwg.mxu0
    %v1149 = vadd.f32 %v1102, %v1143
    %v1150 = vadd.f32 %v1103, %v1145
    %v1151 = vxor.u32 %v1149, 2147483648
    %v1152 = vxor.u32 %v1150, 2147483648
    %v1153 = vmul.f32 %v1151, 1.442695
    %v1154 = vpow.pop %v1153
    %v1155 = vmul.f32 %v1152, 1.442695
    %v1156 = vpow.pop %v1155
    %v1157 = vadd.f32 %v1154, 1.0
    %v1158 = vadd.f32 %v1156, 1.0
    %v1159 = vrcp.pop %v1157
    %v1160 = vmul.f32 1.0, %v1159
    %v1161 = vrcp.pop %v1158
    %v1162 = vmul.f32 1.0, %v1161
    %v1163 = vtanh.pop %v1150
    %v1164 = vmul.f32 %v1160, %v1090
    %1166 = vrot.lane.b32.xlu0 %v1163, 64
    %v1167 = vpop.permute.xlu0 %1166
    %v1169 = vmul.f32 %v1160, %v1167
    %1171 = vrot.lane.b32.xlu0 %v1169, 64
    %v1172 = vpop.permute.xlu0 %1171
    %v1174 = vadd.f32 %v1164, %v1172
    %v1175 = vtanh.pop %v1174
    %1177 = vrot.lane.b32.xlu0 %v1175, 64
    %v1178 = vpop.permute.xlu0 %1177
    %v1180 = vmul.f32 %v1162, %v1178
    %1181 = vst.msk [vmem:[%s586] sm:$0xff] %vm584, %v1180
    %1182 = vst.msk [vmem:[#allocation3] sm:$0xff] %vm587, %v1180
    %vm1183 = vcmask 254976
    %1184 = vst.msk [vmem:[%s5] sm:$0x3] %vm1183, %v1180
    %1186 = vrot.lane.b32.xlu0 %v1180, 96
    %v1187 = vpop.permute.xlu0 %1186
    %s1189 = scalar_lea.vmem %s5, 2
    %1190 = vst.msk [vmem:[%s1189] sm:$0x3] %vm1183, %v1187
    %1192 = vrot.lane.b32.xlu0 %v1174, 64
    %v1193 = vpop.permute.xlu0 %1192
    %s1195 = scalar_lea.vmem %s5, 4
    %1196 = vst.msk [vmem:[%s1195] sm:$0x3] %vm1183, %v1193
    %1197 = vrot.lane.b32.xlu0 %v1174, 32
    %v1198 = vpop.permute.xlu0 %1197
    %s1200 = scalar_lea.vmem %s5, 6
    %1201 = vst.msk [vmem:[%s1200] sm:$0x3] %vm1183, %v1198
    %v1202 = vld [vmem:[#allocation4 + $0x100] sm:$0xf]
    %v1203 = vld [vmem:[#allocation4 + $0x108] sm:$0xf]
    %v1204 = vld [vmem:[#allocation4 + $0x110] sm:$0xf]
    %v1205 = vld [vmem:[#allocation4 + $0x118] sm:$0xf]
    %v1206 = vld [vmem:[#allocation4 + $0x120] sm:$0xf]
    %v1207 = vld [vmem:[#allocation4 + $0x128] sm:$0xf]
    %v1208 = vld [vmem:[#allocation4 + $0x130] sm:$0xf]
    %v1209 = vld [vmem:[#allocation4 + $0x138] sm:$0xf]
    %v1210 = vld [vmem:[#allocation3] sm:$0xff]
    %v1211 = vld [vmem:[#allocation3 + $0x8] sm:$0xff]
    %v1212 = vld [vmem:[#allocation3 + $0x10] sm:$0xff]
    %v1213 = vld [vmem:[#allocation3 + $0x18] sm:$0xff]
    %v1214 = vld [vmem:[#allocation3 + $0x20] sm:$0xff]
    %v1215 = vld [vmem:[#allocation3 + $0x28] sm:$0xff]
    %v1216 = vld [vmem:[#allocation3 + $0x30] sm:$0xff]
    %v1217 = vld [vmem:[#allocation3 + $0x38] sm:$0xff]
    %v1218 = vpack.c.bf16 %v1211, %v1210
    %v1219 = vpack.c.bf16 %v1213, %v1212
    %v1220 = vpack.c.bf16 %v1215, %v1214
    %v1221 = vpack.c.bf16 %v1217, %v1216
    %v1222 = vld [vmem:[%s3 + $0x1] sm:$0x1]
    %v1223 = vlaneseq
    %v1224 = vshrl.u32 %v1223, 7
    %v1225 = vsub.s32 0, %v1224
    %v1226 = vrot.slane %v1222, %v1225
    %v1235 = vunpack.c.l.b16 %v1202
    %v1236 = vunpack.c.l.b16 %v1203
    %v1237 = vunpack.c.l.b16 %v1204
    %v1238 = vunpack.c.l.b16 %v1205
    %v1239 = vunpack.c.l.b16 %v1206
    %v1240 = vunpack.c.l.b16 %v1207
    %v1241 = vunpack.c.l.b16 %v1208
    %v1242 = vunpack.c.l.b16 %v1209
    %v1243 = vpack.c.b16 %v1236, %v1235
    %v1244 = vpack.c.b16 %v1238, %v1237
    %v1245 = vpack.c.b16 %v1240, %v1239
    %v1246 = vpack.c.b16 %v1242, %v1241
    %v1252 = vsel %vm345, %v1218, 0
    %v1255 = vsel %vm345, %v1219, 0
    %v1258 = vsel %vm345, %v1220, 0
    %v1261 = vsel %vm345, %v1221, 0
    %1263 = vmatprep.subr.bf16.mxu0 0
    %1264 = vmatpush1.bf16.msra.mxu0 %v1243
    %1265 = vmatprep.subr.bf16.mxu0 0
    %1266 = vmatpush1.bf16.msra.mxu0 %v1244
    %1267 = vmatprep.subr.bf16.mxu0 0
    %1268 = vmatpush1.bf16.msra.mxu0 %v1245
    %1269 = vmatprep.subr.bf16.mxu0 0
    %1270 = vmatpush1.bf16.msra.mxu0 %v1246
    %1271 = vmatprep.subr.bf16.mxu0 0
    %1272 = vmatpush1.bf16.msra.mxu0 0
    %1273 = vmatprep.subr.bf16.mxu0 0
    %1274 = vmatpush1.bf16.msra.mxu0 0
    %1275 = vmatprep.subr.bf16.mxu0 0
    %1276 = vmatpush1.bf16.msra.mxu0 0
    %1277 = vmatprep.subr.bf16.mxu0 0
    %1278 = vmatpush1.bf16.msra.mxu0 0
    %1279 = vmatprep.subr.bf16.mxu0 0
    %1280 = vmatpush1.bf16.msra.mxu0 0
    %1281 = vmatprep.subr.bf16.mxu0 0
    %1282 = vmatpush1.bf16.msra.mxu0 0
    %1283 = vmatprep.subr.bf16.mxu0 0
    %1284 = vmatpush1.bf16.msra.mxu0 0
    %1285 = vmatprep.subr.bf16.mxu0 0
    %1286 = vmatpush1.bf16.msra.mxu0 0
    %1287 = vmatprep.subr.bf16.mxu0 0
    %1288 = vmatpush1.bf16.msra.mxu0 0
    %1289 = vmatprep.subr.bf16.mxu0 0
    %1290 = vmatpush1.bf16.msra.mxu0 0
    %1291 = vmatprep.subr.bf16.mxu0 0
    %1292 = vmatpush1.bf16.msra.mxu0 0
    %1293 = vmatprep.subr.bf16.mxu0 0
    %1294 = vmatpush1.bf16.msra.mxu0 0
    %1295 = vmatprep.mubr.bf16.mxu0 0
    %1296 = vmatmul.mubr.bf16.gmra.mrb[0].mxu0 %v1252
    %v1297 = vpop.f32.mrb[0].mxu0
    %v1298 = vadd.f32 %v1226, %v1297
    %v1299 = vpop.f32.mrb[0].mxu0
    %v1300 = vpop.f32.mrb[0].mxu0
    %v1301 = vadd.f32 %v1226, %v1300
    %v1302 = vpop.f32.mrb[0].mxu0
    %1303 = vmatprep.mubr.bf16.mxu0 0
    %1304 = vmatmul.mubr.bf16.gmra.mrb[0].mxu0 %v1255
    %v1305 = vpop.f32.mrb[0].mxu0
    %v1306 = vadd.f32 %v1226, %v1305
    %v1307 = vpop.f32.mrb[0].mxu0
    %v1308 = vpop.f32.mrb[0].mxu0
    %v1309 = vadd.f32 %v1226, %v1308
    %v1310 = vpop.f32.mrb[0].mxu0
    %1311 = vmatprep.mubr.bf16.mxu0 0
    %1312 = vmatmul.mubr.bf16.gmra.mrb[0].mxu0 %v1258
    %v1313 = vpop.f32.mrb[0].mxu0
    %v1314 = vadd.f32 %v1226, %v1313
    %v1315 = vpop.f32.mrb[0].mxu0
    %v1316 = vpop.f32.mrb[0].mxu0
    %v1317 = vadd.f32 %v1226, %v1316
    %v1318 = vpop.f32.mrb[0].mxu0
    %1319 = vmatprep.mubr.bf16.mxu0 0
    %1320 = vmatmul.mubr.bf16.gmra.mrb[0].mxu0 %v1261
    %v1321 = vpop.f32.mrb[0].mxu0
    %v1322 = vadd.f32 %v1226, %v1321
    %v1323 = vpop.f32.mrb[0].mxu0
    %v1324 = vpop.f32.mrb[0].mxu0
    %v1325 = vadd.f32 %v1226, %v1324
    %v1326 = vpop.f32.mrb[0].mxu0
    %1327 = vdwg.mxu0
    %1328 = vst [vmem:[%s4] sm:$0xff] %v1298
    %1329 = vst [vmem:[%s4 + $0x8] sm:$0xff] %v1301
    %1330 = vst [vmem:[%s4 + $0x10] sm:$0xff] %v1306
    %1331 = vst [vmem:[%s4 + $0x18] sm:$0xff] %v1309
    %1332 = vst [vmem:[%s4 + $0x20] sm:$0xff] %v1314
    %1333 = vst [vmem:[%s4 + $0x28] sm:$0xff] %v1317
    %1334 = vst [vmem:[%s4 + $0x30] sm:$0xff] %v1322
    %1335 = vst [vmem:[%s4 + $0x38] sm:$0xff] %v1325
    // Predicated region
    $region22: #{rnnlm_forward.1} parent=1 // pred_check
      _
    $region23: #{rnnlm_forward.1} parent=1 // pred_check_branch
      %1337 = sbr.rel (0) target = $region25
    $region24: #{rnnlm_forward.1} parent=1 // pred_region
      _
    $region25: #{rnnlm_forward.1} parent=1 // pred_fallthru
      _
    // Predicated region
    $region26: #{rnnlm_forward.1} parent=1 // pred_check
      _
    $region27: #{rnnlm_forward.1} parent=1 // pred_check_branch
      %1339 = sbr.rel (0) target = $region29
    $region28: #{rnnlm_forward.1} parent=1 // pred_region
      _
    $region29: #{rnnlm_forward.1} parent=1 // pred_fallthru
      _
    // Predicated region
    $region30: #{rnnlm_forward.1} parent=1 // pred_check
      _
    $region31: #{rnnlm_forward.1} parent=1 // pred_check_branch
      %1341 = sbr.rel (0) target = $region33
    $region32: #{rnnlm_forward.1} parent=1 // pred_region
      _
    $region33: #{rnnlm_forward.1} parent=1 // pred_fallthru
      _
    // Predicated region
    $region34: #{rnnlm_forward.1} parent=1 // pred_check
      _
    $region35: #{rnnlm_forward.1} parent=1 // pred_check_branch
      %1343 = sbr.rel (0) target = $region37
    $region36: #{rnnlm_forward.1} parent=1 // pred_region
      _
    $region37: #{rnnlm_forward.1} parent=1 // pred_fallthru
      _
    %1344 = vsyncpa [#allocation5], 1

</llo_original>
